<compile_context>
chip_gen: v5e
topology: v5e:2x2
jax: 0.10.0
libtpu: 0.0.40
codegen_flags: <defaults>
</compile_context>

<pallas_src>
import jax
import jax.numpy as jnp
from jax.experimental import pallas as pl
from jax.experimental.pallas import tpu as pltpu


# ----------------------------- Pallas kernel -------------------------------

def fnn_kernel(idx_ref,    # (F, TILE_B)  int32   feature indices (streamed)
               tabT_ref,   # (D, V)       f32     embedding table, transposed
               w1T_ref,    # (H1, D)      bf16
               b1_ref,     # (H1, 1)      f32
               w2T_ref,    # (H2, H1)     bf16
               b2_ref,     # (H2, 1)      f32
               w3_ref,     # (H2, 1)      f32
               b3_ref,     # (1, 1)       f32     (SMEM scalar)
               out_ref):   # (1, TILE_B)  f32     lane-dense output
    F, TB = idx_ref.shape
    D, V = tabT_ref.shape
    tabT = tabT_ref[...]                                   # (D, V) f32

    # FM aggregation accumulators (features on sublanes, batch on lanes).
    s = jnp.zeros((D, TB), jnp.float32)
    sq = jnp.zeros((D, TB), jnp.float32)

    # Fused embedding gather + max_norm=1 renorm, one field at a time
    # (F is small and static -> unrolled; the field-sum is pure VPU adds).
    for f in range(F):
        row = idx_ref[f:f + 1, :]                          # (1, TB) int32
        sel = jax.lax.broadcasted_iota(jnp.int32, (V, TB), 0) == row
        # one-hot gather on the MXU: (D, V) @ (V, TB) -> (D, TB), exact.
        e = jnp.dot(tabT, sel.astype(jnp.float32),
                    preferred_element_type=jnp.float32)
        # nn.Embedding(max_norm=1): rescale rows with L2 norm > 1.
        nrm = jnp.sqrt(jnp.sum(e * e, axis=0, keepdims=True))   # (1, TB)
        e = e * jnp.minimum(1.0, 1.0 / jnp.maximum(nrm, 1e-7))
        s = s + e
        sq = sq + e * e

    # FM second-order term: (sum_f e)^2 - sum_f e^2         (D, TB) f32
    fm = s * s - sq

    # MLP (transposed): bf16 MXU operands, f32 accumulation.
    h1 = jnp.dot(w1T_ref[...], fm.astype(jnp.bfloat16),
                 preferred_element_type=jnp.float32) + b1_ref[...]
    h1 = jnp.maximum(h1, 0.0)                              # (H1, TB)
    h2 = jnp.dot(w2T_ref[...], h1.astype(jnp.bfloat16),
                 preferred_element_type=jnp.float32) + b2_ref[...]
    h2 = jnp.maximum(h2, 0.0)                              # (H2, TB)
    # (Dropout(0.5) is identity in eval mode.)

    # Final Linear(H2 -> 1) as VPU multiply + sublane reduce (no N=1 matmul),
    # fused with the sigmoid; result is already a lane-dense (1, TB) slab.
    logits = jnp.sum(h2 * w3_ref[...], axis=0, keepdims=True) + b3_ref[0, 0]
    out_ref[...] = jax.nn.sigmoid(logits)


# ------------------------------- wrapper ------------------------------------

def fnn_forward(feature_index, emb_table, w1, b1, w2, b2, w3, b3, *,
                tile_b=128):
    """feature_index: (B, F) int32; weights in PyTorch-equivalent (in, out)
    layout: w1 (D, D/2), w2 (D/2, D/4), w3 (D/4, 1); biases (1, out)."""
    B, F = feature_index.shape
    V, D = emb_table.shape
    H1 = w1.shape[1]
    H2 = w2.shape[1]

    assert tile_b % 128 == 0  # lane-dense output / v5e-friendly tiles
    n_tiles = pl.cdiv(B, tile_b)
    b_pad = n_tiles * tile_b
    # Keep double-buffered (F, tile_b) index tiles + resident weights well
    # under v7x's 64 MiB VMEM; footprint here is <1 MiB per tile.

    # Pad batch to a tile multiple (padded rows use index 0 and are dropped).
    idx = jnp.zeros((F, b_pad), jnp.int32).at[:, :B].set(
        feature_index.T.astype(jnp.int32))

    tabT = emb_table.T.astype(jnp.float32)        # (D, V)  VMEM-resident
    w1T = w1.T.astype(jnp.bfloat16)               # (H1, D)
    w2T = w2.T.astype(jnp.bfloat16)               # (H2, H1)
    b1c = b1.reshape(H1, 1).astype(jnp.float32)
    b2c = b2.reshape(H2, 1).astype(jnp.float32)
    w3c = w3.reshape(H2, 1).astype(jnp.float32)
    b3s = b3.reshape(1, 1).astype(jnp.float32)

    out = pl.pallas_call(
        fnn_kernel,
        out_shape=jax.ShapeDtypeStruct((1, b_pad), jnp.float32),
        grid=(n_tiles,),
        in_specs=[
            pl.BlockSpec((F, tile_b), lambda i: (0, i)),   # streamed per tile
            pl.BlockSpec((D, V), lambda i: (0, 0)),        # resident table
            pl.BlockSpec((H1, D), lambda i: (0, 0)),       # resident weights
            pl.BlockSpec((H1, 1), lambda i: (0, 0)),
            pl.BlockSpec((H2, H1), lambda i: (0, 0)),
            pl.BlockSpec((H2, 1), lambda i: (0, 0)),
            pl.BlockSpec((H2, 1), lambda i: (0, 0)),
            pl.BlockSpec(memory_space=pltpu.MemorySpace.SMEM),  # b3 scalar
        ],
        out_specs=pl.BlockSpec((1, tile_b), lambda i: (0, i)),  # lane-dense
        compiler_params=pltpu.CompilerParams(
            dimension_semantics=("parallel",)),
    )(idx, tabT, w1T, b1c, w2T, b2c, w3c, b3s)
    return out[0, :B]                                         # (B,)


# --------------------------- pure-JAX reference -----------------------------

def fnn_reference(feature_index, emb_table, w1, b1, w2, b2, w3, b3):
    e = jnp.take(emb_table, feature_index, axis=0)            # (B, F, D)
    nrm = jnp.sqrt(jnp.sum(e * e, axis=-1, keepdims=True))
    e = e * jnp.minimum(1.0, 1.0 / jnp.maximum(nrm, 1e-7))
    s = jnp.sum(e, axis=1)
    fm = s * s - jnp.sum(e * e, axis=1)
    h1 = jnp.maximum(
        jnp.dot(fm.astype(jnp.bfloat16), w1.astype(jnp.bfloat16),
                preferred_element_type=jnp.float32) + b1, 0.0)
    h2 = jnp.maximum(
        jnp.dot(h1.astype(jnp.bfloat16), w2.astype(jnp.bfloat16),
                preferred_element_type=jnp.float32) + b2, 0.0)
    logits = h2 @ w3 + b3
    return jax.nn.sigmoid(jnp.squeeze(logits, axis=-1))


# --------------------------------- demo --------------------------------------

if __name__ == "__main__":
    key = jax.random.PRNGKey(0)
    (k_emb, k_u, k_i, k_w1, k_b1, k_w2, k_b2, k_w3, k_b3,
     k_uid, k_iid) = jax.random.split(key, 11)

    # Small, shape-consistent problem.
    n_features = 64          # vocabulary of feature indices
    dim = 128                # embedding dim (module default)
    n_users, n_items = 10, 12
    f_user, f_item = 3, 3    # feature columns per user / per item
    B = 8                    # batch size

    # Deterministic "dataframes": integer feature-index tables.
    user_df = jax.random.randint(k_u, (n_users, f_user), 0, n_features)
    item_df = jax.random.randint(k_i, (n_items, f_item), 0, n_features)

    # Deterministic parameters (PyTorch (in, out) layout).
    emb_table = jax.random.normal(k_emb, (n_features, dim), jnp.float32) * 0.5
    w1 = jax.random.normal(k_w1, (dim, dim // 2), jnp.float32) * 0.05
    b1 = jax.random.normal(k_b1, (1, dim // 2), jnp.float32) * 0.05
    w2 = jax.random.normal(k_w2, (dim // 2, dim // 4), jnp.float32) * 0.05
    b2 = jax.random.normal(k_b2, (1, dim // 4), jnp.float32) * 0.05
    w3 = jax.random.normal(k_w3, (dim // 4, 1), jnp.float32) * 0.05
    b3 = jax.random.normal(k_b3, (1, 1), jnp.float32) * 0.05

    # Batch of user / item ids -> __getAllFeatures: concat feature indices.
    u = jax.random.randint(k_uid, (B,), 0, n_users)
    i = jax.random.randint(k_iid, (B,), 0, n_items)
    all_feature_index = jnp.concatenate(
        [jnp.take(user_df, u, axis=0), jnp.take(item_df, i, axis=0)], axis=1)

    out = fnn_forward(all_feature_index, emb_table, w1, b1, w2, b2, w3, b3)
    out = jax.block_until_ready(out)

    ref = fnn_reference(all_feature_index, emb_table, w1, b1, w2, b2, w3, b3)
    assert out.shape == (B,)
    # Tolerance accounts for bf16 MXU operands (same rounding in reference)
    # and f32 accumulation-order / EUP transcendental differences.
    assert jnp.allclose(out, ref, atol=2e-3, rtol=2e-3), (out, ref)

    print("KERNEL_OK")
</pallas_src>

<mosaic_0001>
module attributes {stable_mosaic.version = 11 : i64} {
  func.func @fnn_kernel(%arg0: i32, %arg1: memref<6x128xi32, #tpu.memory_space<vmem>>, %arg2: memref<128x64xf32, #tpu.memory_space<vmem>>, %arg3: memref<64x128xbf16, #tpu.memory_space<vmem>>, %arg4: memref<64x1xf32, #tpu.memory_space<vmem>>, %arg5: memref<32x64xbf16, #tpu.memory_space<vmem>>, %arg6: memref<32x1xf32, #tpu.memory_space<vmem>>, %arg7: memref<32x1xf32, #tpu.memory_space<vmem>>, %arg8: memref<1x1xf32, #tpu.memory_space<smem>>, %arg9: memref<1x128xf32, #tpu.memory_space<vmem>>) attributes {dimension_semantics = [#tpu.dimension_semantics<parallel>], iteration_bounds = array<i64: 1>, scalar_prefetch = 0 : i64, scratch_operands = 0 : i64, tpu.core_type = #tpu.core_type<tc>, window_params = [{transform_indices = @transform_0, window_bounds = array<i64: 6, 128>}, {pipeline_mode = #tpu.pipeline_mode<synchronous>, transform_indices = @transform_1, window_bounds = array<i64: 128, 64>}, {pipeline_mode = #tpu.pipeline_mode<synchronous>, transform_indices = @transform_2, window_bounds = array<i64: 64, 128>}, {pipeline_mode = #tpu.pipeline_mode<synchronous>, transform_indices = @transform_3, window_bounds = array<i64: 64, 1>}, {pipeline_mode = #tpu.pipeline_mode<synchronous>, transform_indices = @transform_4, window_bounds = array<i64: 32, 64>}, {pipeline_mode = #tpu.pipeline_mode<synchronous>, transform_indices = @transform_5, window_bounds = array<i64: 32, 1>}, {pipeline_mode = #tpu.pipeline_mode<synchronous>, transform_indices = @transform_6, window_bounds = array<i64: 32, 1>}, {transform_indices = @transform_7, window_bounds = array<i64: 1, 1>}, {transform_indices = @transform_8, window_bounds = array<i64: 1, 128>}]} {
    %c0 = arith.constant 0 : index
    %c0_0 = arith.constant 0 : index
    %0 = vector.load %arg2[%c0, %c0_0] : memref<128x64xf32, #tpu.memory_space<vmem>>, vector<128x64xf32>
    %cst = arith.constant 0.000000e+00 : f32
    %1 = vector.broadcast %cst : f32 to vector<128x128xf32>
    %cst_1 = arith.constant 0.000000e+00 : f32
    %2 = vector.broadcast %cst_1 : f32 to vector<128x128xf32>
    %c0_2 = arith.constant 0 : index
    %c0_3 = arith.constant 0 : index
    %3 = vector.load %arg1[%c0_2, %c0_3] : memref<6x128xi32, #tpu.memory_space<vmem>>, vector<1x128xi32>
    %4 = tpu.iota {dimensions = array<i32: 0>} : vector<64x128xi32>
    %5 = vector.broadcast %3 : vector<1x128xi32> to vector<64x128xi32>
    %6 = arith.cmpi eq, %4, %5 : vector<64x128xi32>
    %7 = arith.extui %6 : vector<64x128xi1> to vector<64x128xi32>
    %8 = arith.sitofp %7 : vector<64x128xi32> to vector<64x128xf32>
    %cst_4 = arith.constant dense<0.000000e+00> : vector<128x128xf32>
    %9 = tpu.matmul %0, %8, %cst_4 {dimension_numbers = #tpu.dot_dimension_numbers<[1], [0], [0], [1], [0, 0, 1, 1], [], []>} : vector<128x64xf32>, vector<64x128xf32>, vector<128x128xf32> -> vector<128x128xf32>
    %10 = arith.mulf %9, %9 : vector<128x128xf32>
    %cst_5 = arith.constant dense<0.000000e+00> : vector<128xf32>
    %11 = vector.multi_reduction <add>, %10, %cst_5 [0] : vector<128x128xf32> to vector<128xf32>
    %12 = vector.shape_cast %11 : vector<128xf32> to vector<1x128xf32>
    %13 = math.sqrt %12 : vector<1x128xf32>
    %cst_6 = arith.constant 1.000000e-07 : f32
    %14 = vector.broadcast %cst_6 : f32 to vector<1x128xf32>
    %15 = arith.maximumf %13, %14 : vector<1x128xf32>
    %cst_7 = arith.constant 1.000000e+00 : f32
    %16 = vector.broadcast %cst_7 : f32 to vector<1x128xf32>
    %17 = arith.divf %16, %15 : vector<1x128xf32>
    %cst_8 = arith.constant 1.000000e+00 : f32
    %18 = vector.broadcast %cst_8 : f32 to vector<1x128xf32>
    %19 = arith.minimumf %18, %17 : vector<1x128xf32>
    %20 = vector.broadcast %19 : vector<1x128xf32> to vector<128x128xf32>
    %21 = arith.mulf %9, %20 : vector<128x128xf32>
    %22 = arith.addf %1, %21 : vector<128x128xf32>
    %23 = arith.mulf %21, %21 : vector<128x128xf32>
    %24 = arith.addf %2, %23 : vector<128x128xf32>
    %c1 = arith.constant 1 : index
    %c0_9 = arith.constant 0 : index
    %25 = vector.load %arg1[%c1, %c0_9] : memref<6x128xi32, #tpu.memory_space<vmem>>, vector<1x128xi32>
    %26 = tpu.iota {dimensions = array<i32: 0>} : vector<64x128xi32>
    %27 = vector.broadcast %25 : vector<1x128xi32> to vector<64x128xi32>
    %28 = arith.cmpi eq, %26, %27 : vector<64x128xi32>
    %29 = arith.extui %28 : vector<64x128xi1> to vector<64x128xi32>
    %30 = arith.sitofp %29 : vector<64x128xi32> to vector<64x128xf32>
    %cst_10 = arith.constant dense<0.000000e+00> : vector<128x128xf32>
    %31 = tpu.matmul %0, %30, %cst_10 {dimension_numbers = #tpu.dot_dimension_numbers<[1], [0], [0], [1], [0, 0, 1, 1], [], []>} : vector<128x64xf32>, vector<64x128xf32>, vector<128x128xf32> -> vector<128x128xf32>
    %32 = arith.mulf %31, %31 : vector<128x128xf32>
    %cst_11 = arith.constant dense<0.000000e+00> : vector<128xf32>
    %33 = vector.multi_reduction <add>, %32, %cst_11 [0] : vector<128x128xf32> to vector<128xf32>
    %34 = vector.shape_cast %33 : vector<128xf32> to vector<1x128xf32>
    %35 = math.sqrt %34 : vector<1x128xf32>
    %cst_12 = arith.constant 1.000000e-07 : f32
    %36 = vector.broadcast %cst_12 : f32 to vector<1x128xf32>
    %37 = arith.maximumf %35, %36 : vector<1x128xf32>
    %cst_13 = arith.constant 1.000000e+00 : f32
    %38 = vector.broadcast %cst_13 : f32 to vector<1x128xf32>
    %39 = arith.divf %38, %37 : vector<1x128xf32>
    %cst_14 = arith.constant 1.000000e+00 : f32
    %40 = vector.broadcast %cst_14 : f32 to vector<1x128xf32>
    %41 = arith.minimumf %40, %39 : vector<1x128xf32>
    %42 = vector.broadcast %41 : vector<1x128xf32> to vector<128x128xf32>
    %43 = arith.mulf %31, %42 : vector<128x128xf32>
    %44 = arith.addf %22, %43 : vector<128x128xf32>
    %45 = arith.mulf %43, %43 : vector<128x128xf32>
    %46 = arith.addf %24, %45 : vector<128x128xf32>
    %c2 = arith.constant 2 : index
    %c0_15 = arith.constant 0 : index
    %47 = vector.load %arg1[%c2, %c0_15] : memref<6x128xi32, #tpu.memory_space<vmem>>, vector<1x128xi32>
    %48 = tpu.iota {dimensions = array<i32: 0>} : vector<64x128xi32>
    %49 = vector.broadcast %47 : vector<1x128xi32> to vector<64x128xi32>
    %50 = arith.cmpi eq, %48, %49 : vector<64x128xi32>
    %51 = arith.extui %50 : vector<64x128xi1> to vector<64x128xi32>
    %52 = arith.sitofp %51 : vector<64x128xi32> to vector<64x128xf32>
    %cst_16 = arith.constant dense<0.000000e+00> : vector<128x128xf32>
    %53 = tpu.matmul %0, %52, %cst_16 {dimension_numbers = #tpu.dot_dimension_numbers<[1], [0], [0], [1], [0, 0, 1, 1], [], []>} : vector<128x64xf32>, vector<64x128xf32>, vector<128x128xf32> -> vector<128x128xf32>
    %54 = arith.mulf %53, %53 : vector<128x128xf32>
    %cst_17 = arith.constant dense<0.000000e+00> : vector<128xf32>
    %55 = vector.multi_reduction <add>, %54, %cst_17 [0] : vector<128x128xf32> to vector<128xf32>
    %56 = vector.shape_cast %55 : vector<128xf32> to vector<1x128xf32>
    %57 = math.sqrt %56 : vector<1x128xf32>
    %cst_18 = arith.constant 1.000000e-07 : f32
    %58 = vector.broadcast %cst_18 : f32 to vector<1x128xf32>
    %59 = arith.maximumf %57, %58 : vector<1x128xf32>
    %cst_19 = arith.constant 1.000000e+00 : f32
    %60 = vector.broadcast %cst_19 : f32 to vector<1x128xf32>
    %61 = arith.divf %60, %59 : vector<1x128xf32>
    %cst_20 = arith.constant 1.000000e+00 : f32
    %62 = vector.broadcast %cst_20 : f32 to vector<1x128xf32>
    %63 = arith.minimumf %62, %61 : vector<1x128xf32>
    %64 = vector.broadcast %63 : vector<1x128xf32> to vector<128x128xf32>
    %65 = arith.mulf %53, %64 : vector<128x128xf32>
    %66 = arith.addf %44, %65 : vector<128x128xf32>
    %67 = arith.mulf %65, %65 : vector<128x128xf32>
    %68 = arith.addf %46, %67 : vector<128x128xf32>
    %c3 = arith.constant 3 : index
    %c0_21 = arith.constant 0 : index
    %69 = vector.load %arg1[%c3, %c0_21] : memref<6x128xi32, #tpu.memory_space<vmem>>, vector<1x128xi32>
    %70 = tpu.iota {dimensions = array<i32: 0>} : vector<64x128xi32>
    %71 = vector.broadcast %69 : vector<1x128xi32> to vector<64x128xi32>
    %72 = arith.cmpi eq, %70, %71 : vector<64x128xi32>
    %73 = arith.extui %72 : vector<64x128xi1> to vector<64x128xi32>
    %74 = arith.sitofp %73 : vector<64x128xi32> to vector<64x128xf32>
    %cst_22 = arith.constant dense<0.000000e+00> : vector<128x128xf32>
    %75 = tpu.matmul %0, %74, %cst_22 {dimension_numbers = #tpu.dot_dimension_numbers<[1], [0], [0], [1], [0, 0, 1, 1], [], []>} : vector<128x64xf32>, vector<64x128xf32>, vector<128x128xf32> -> vector<128x128xf32>
    %76 = arith.mulf %75, %75 : vector<128x128xf32>
    %cst_23 = arith.constant dense<0.000000e+00> : vector<128xf32>
    %77 = vector.multi_reduction <add>, %76, %cst_23 [0] : vector<128x128xf32> to vector<128xf32>
    %78 = vector.shape_cast %77 : vector<128xf32> to vector<1x128xf32>
    %79 = math.sqrt %78 : vector<1x128xf32>
    %cst_24 = arith.constant 1.000000e-07 : f32
    %80 = vector.broadcast %cst_24 : f32 to vector<1x128xf32>
    %81 = arith.maximumf %79, %80 : vector<1x128xf32>
    %cst_25 = arith.constant 1.000000e+00 : f32
    %82 = vector.broadcast %cst_25 : f32 to vector<1x128xf32>
    %83 = arith.divf %82, %81 : vector<1x128xf32>
    %cst_26 = arith.constant 1.000000e+00 : f32
    %84 = vector.broadcast %cst_26 : f32 to vector<1x128xf32>
    %85 = arith.minimumf %84, %83 : vector<1x128xf32>
    %86 = vector.broadcast %85 : vector<1x128xf32> to vector<128x128xf32>
    %87 = arith.mulf %75, %86 : vector<128x128xf32>
    %88 = arith.addf %66, %87 : vector<128x128xf32>
    %89 = arith.mulf %87, %87 : vector<128x128xf32>
    %90 = arith.addf %68, %89 : vector<128x128xf32>
    %c4 = arith.constant 4 : index
    %c0_27 = arith.constant 0 : index
    %91 = vector.load %arg1[%c4, %c0_27] : memref<6x128xi32, #tpu.memory_space<vmem>>, vector<1x128xi32>
    %92 = tpu.iota {dimensions = array<i32: 0>} : vector<64x128xi32>
    %93 = vector.broadcast %91 : vector<1x128xi32> to vector<64x128xi32>
    %94 = arith.cmpi eq, %92, %93 : vector<64x128xi32>
    %95 = arith.extui %94 : vector<64x128xi1> to vector<64x128xi32>
    %96 = arith.sitofp %95 : vector<64x128xi32> to vector<64x128xf32>
    %cst_28 = arith.constant dense<0.000000e+00> : vector<128x128xf32>
    %97 = tpu.matmul %0, %96, %cst_28 {dimension_numbers = #tpu.dot_dimension_numbers<[1], [0], [0], [1], [0, 0, 1, 1], [], []>} : vector<128x64xf32>, vector<64x128xf32>, vector<128x128xf32> -> vector<128x128xf32>
    %98 = arith.mulf %97, %97 : vector<128x128xf32>
    %cst_29 = arith.constant dense<0.000000e+00> : vector<128xf32>
    %99 = vector.multi_reduction <add>, %98, %cst_29 [0] : vector<128x128xf32> to vector<128xf32>
    %100 = vector.shape_cast %99 : vector<128xf32> to vector<1x128xf32>
    %101 = math.sqrt %100 : vector<1x128xf32>
    %cst_30 = arith.constant 1.000000e-07 : f32
    %102 = vector.broadcast %cst_30 : f32 to vector<1x128xf32>
    %103 = arith.maximumf %101, %102 : vector<1x128xf32>
    %cst_31 = arith.constant 1.000000e+00 : f32
    %104 = vector.broadcast %cst_31 : f32 to vector<1x128xf32>
    %105 = arith.divf %104, %103 : vector<1x128xf32>
    %cst_32 = arith.constant 1.000000e+00 : f32
    %106 = vector.broadcast %cst_32 : f32 to vector<1x128xf32>
    %107 = arith.minimumf %106, %105 : vector<1x128xf32>
    %108 = vector.broadcast %107 : vector<1x128xf32> to vector<128x128xf32>
    %109 = arith.mulf %97, %108 : vector<128x128xf32>
    %110 = arith.addf %88, %109 : vector<128x128xf32>
    %111 = arith.mulf %109, %109 : vector<128x128xf32>
    %112 = arith.addf %90, %111 : vector<128x128xf32>
    %c5 = arith.constant 5 : index
    %c0_33 = arith.constant 0 : index
    %113 = vector.load %arg1[%c5, %c0_33] : memref<6x128xi32, #tpu.memory_space<vmem>>, vector<1x128xi32>
    %114 = tpu.iota {dimensions = array<i32: 0>} : vector<64x128xi32>
    %115 = vector.broadcast %113 : vector<1x128xi32> to vector<64x128xi32>
    %116 = arith.cmpi eq, %114, %115 : vector<64x128xi32>
    %117 = arith.extui %116 : vector<64x128xi1> to vector<64x128xi32>
    %118 = arith.sitofp %117 : vector<64x128xi32> to vector<64x128xf32>
    %cst_34 = arith.constant dense<0.000000e+00> : vector<128x128xf32>
    %119 = tpu.matmul %0, %118, %cst_34 {dimension_numbers = #tpu.dot_dimension_numbers<[1], [0], [0], [1], [0, 0, 1, 1], [], []>} : vector<128x64xf32>, vector<64x128xf32>, vector<128x128xf32> -> vector<128x128xf32>
    %120 = arith.mulf %119, %119 : vector<128x128xf32>
    %cst_35 = arith.constant dense<0.000000e+00> : vector<128xf32>
    %121 = vector.multi_reduction <add>, %120, %cst_35 [0] : vector<128x128xf32> to vector<128xf32>
    %122 = vector.shape_cast %121 : vector<128xf32> to vector<1x128xf32>
    %123 = math.sqrt %122 : vector<1x128xf32>
    %cst_36 = arith.constant 1.000000e-07 : f32
    %124 = vector.broadcast %cst_36 : f32 to vector<1x128xf32>
    %125 = arith.maximumf %123, %124 : vector<1x128xf32>
    %cst_37 = arith.constant 1.000000e+00 : f32
    %126 = vector.broadcast %cst_37 : f32 to vector<1x128xf32>
    %127 = arith.divf %126, %125 : vector<1x128xf32>
    %cst_38 = arith.constant 1.000000e+00 : f32
    %128 = vector.broadcast %cst_38 : f32 to vector<1x128xf32>
    %129 = arith.minimumf %128, %127 : vector<1x128xf32>
    %130 = vector.broadcast %129 : vector<1x128xf32> to vector<128x128xf32>
    %131 = arith.mulf %119, %130 : vector<128x128xf32>
    %132 = arith.addf %110, %131 : vector<128x128xf32>
    %133 = arith.mulf %131, %131 : vector<128x128xf32>
    %134 = arith.addf %112, %133 : vector<128x128xf32>
    %135 = arith.mulf %132, %132 : vector<128x128xf32>
    %136 = arith.subf %135, %134 : vector<128x128xf32>
    %c0_39 = arith.constant 0 : index
    %c0_40 = arith.constant 0 : index
    %137 = vector.load %arg3[%c0_39, %c0_40] : memref<64x128xbf16, #tpu.memory_space<vmem>>, vector<64x128xbf16>
    %138 = arith.truncf %136 : vector<128x128xf32> to vector<128x128xbf16>
    %cst_41 = arith.constant dense<0.000000e+00> : vector<64x128xf32>
    %139 = tpu.matmul %137, %138, %cst_41 {dimension_numbers = #tpu.dot_dimension_numbers<[1], [0], [0], [1], [0, 0, 1, 1], [], []>} : vector<64x128xbf16>, vector<128x128xbf16>, vector<64x128xf32> -> vector<64x128xf32>
    %c0_42 = arith.constant 0 : index
    %c0_43 = arith.constant 0 : index
    %140 = vector.load %arg4[%c0_42, %c0_43] : memref<64x1xf32, #tpu.memory_space<vmem>>, vector<64x1xf32>
    %141 = vector.broadcast %140 : vector<64x1xf32> to vector<64x128xf32>
    %142 = arith.addf %139, %141 : vector<64x128xf32>
    %cst_44 = arith.constant 0.000000e+00 : f32
    %143 = vector.broadcast %cst_44 : f32 to vector<64x128xf32>
    %144 = arith.maximumf %142, %143 : vector<64x128xf32>
    %c0_45 = arith.constant 0 : index
    %c0_46 = arith.constant 0 : index
    %145 = vector.load %arg5[%c0_45, %c0_46] : memref<32x64xbf16, #tpu.memory_space<vmem>>, vector<32x64xbf16>
    %146 = arith.truncf %144 : vector<64x128xf32> to vector<64x128xbf16>
    %cst_47 = arith.constant dense<0.000000e+00> : vector<32x128xf32>
    %147 = tpu.matmul %145, %146, %cst_47 {dimension_numbers = #tpu.dot_dimension_numbers<[1], [0], [0], [1], [0, 0, 1, 1], [], []>} : vector<32x64xbf16>, vector<64x128xbf16>, vector<32x128xf32> -> vector<32x128xf32>
    %c0_48 = arith.constant 0 : index
    %c0_49 = arith.constant 0 : index
    %148 = vector.load %arg6[%c0_48, %c0_49] : memref<32x1xf32, #tpu.memory_space<vmem>>, vector<32x1xf32>
    %149 = vector.broadcast %148 : vector<32x1xf32> to vector<32x128xf32>
    %150 = arith.addf %147, %149 : vector<32x128xf32>
    %cst_50 = arith.constant 0.000000e+00 : f32
    %151 = vector.broadcast %cst_50 : f32 to vector<32x128xf32>
    %152 = arith.maximumf %150, %151 : vector<32x128xf32>
    %c0_51 = arith.constant 0 : index
    %c0_52 = arith.constant 0 : index
    %153 = vector.load %arg7[%c0_51, %c0_52] : memref<32x1xf32, #tpu.memory_space<vmem>>, vector<32x1xf32>
    %154 = vector.broadcast %153 : vector<32x1xf32> to vector<32x128xf32>
    %155 = arith.mulf %152, %154 : vector<32x128xf32>
    %cst_53 = arith.constant dense<0.000000e+00> : vector<128xf32>
    %156 = vector.multi_reduction <add>, %155, %cst_53 [0] : vector<32x128xf32> to vector<128xf32>
    %157 = vector.shape_cast %156 : vector<128xf32> to vector<1x128xf32>
    %c0_54 = arith.constant 0 : index
    %c0_55 = arith.constant 0 : index
    %158 = memref.load %arg8[%c0_54, %c0_55] : memref<1x1xf32, #tpu.memory_space<smem>>
    %159 = vector.broadcast %158 : f32 to vector<1x128xf32>
    %160 = arith.addf %157, %159 : vector<1x128xf32>
    %161 = arith.negf %160 : vector<1x128xf32>
    %162 = math.exp %161 : vector<1x128xf32>
    %cst_56 = arith.constant 1.000000e+00 : f32
    %163 = vector.broadcast %cst_56 : f32 to vector<1x128xf32>
    %164 = arith.addf %163, %162 : vector<1x128xf32>
    %165 = arith.divf %163, %164 : vector<1x128xf32>
    %c0_57 = arith.constant 0 : index
    %c0_58 = arith.constant 0 : index
    %166 = vector.load %arg9[%c0_57, %c0_58] : memref<1x128xf32, #tpu.memory_space<vmem>>, vector<1x128xf32>
    tpu.vector_store %arg9[%c0_57, %c0_58], %165 {strides = array<i32>} : memref<1x128xf32, #tpu.memory_space<vmem>>, vector<1x128xf32>,
    return
  }
  func.func @transform_0(%arg0: i32) -> (i32, i32) {
    %c0_i32 = arith.constant 0 : i32
    %c0_i32_0 = arith.constant 0 : i32
    return %c0_i32, %arg0 : i32, i32
  }
  func.func @transform_1(%arg0: i32) -> (i32, i32) {
    %c0_i32 = arith.constant 0 : i32
    %c0_i32_0 = arith.constant 0 : i32
    %c0_i32_1 = arith.constant 0 : i32
    return %c0_i32, %c0_i32_0 : i32, i32
  }
  func.func @transform_2(%arg0: i32) -> (i32, i32) {
    %c0_i32 = arith.constant 0 : i32
    %c0_i32_0 = arith.constant 0 : i32
    %c0_i32_1 = arith.constant 0 : i32
    return %c0_i32, %c0_i32_0 : i32, i32
  }
  func.func @transform_3(%arg0: i32) -> (i32, i32) {
    %c0_i32 = arith.constant 0 : i32
    %c0_i32_0 = arith.constant 0 : i32
    %c0_i32_1 = arith.constant 0 : i32
    return %c0_i32, %c0_i32_0 : i32, i32
  }
  func.func @transform_4(%arg0: i32) -> (i32, i32) {
    %c0_i32 = arith.constant 0 : i32
    %c0_i32_0 = arith.constant 0 : i32
    %c0_i32_1 = arith.constant 0 : i32
    return %c0_i32, %c0_i32_0 : i32, i32
  }
  func.func @transform_5(%arg0: i32) -> (i32, i32) {
    %c0_i32 = arith.constant 0 : i32
    %c0_i32_0 = arith.constant 0 : i32
    %c0_i32_1 = arith.constant 0 : i32
    return %c0_i32, %c0_i32_0 : i32, i32
  }
  func.func @transform_6(%arg0: i32) -> (i32, i32) {
    %c0_i32 = arith.constant 0 : i32
    %c0_i32_0 = arith.constant 0 : i32
    %c0_i32_1 = arith.constant 0 : i32
    return %c0_i32, %c0_i32_0 : i32, i32
  }
  func.func @transform_7(%arg0: i32) -> (i32, i32) {
    %c0_i32 = arith.constant 0 : i32
    %c0_i32_0 = arith.constant 0 : i32
    %c0_i32_1 = arith.constant 0 : i32
    return %c0_i32, %c0_i32_0 : i32, i32
  }
  func.func @transform_8(%arg0: i32) -> (i32, i32) {
    %c0_i32 = arith.constant 0 : i32
    %c0_i32_0 = arith.constant 0 : i32
    return %c0_i32, %arg0 : i32, i32
  }
}

</mosaic_0001>

<llo_original>
// kernel: tpu_custom_call.1
$region0: #{tpu_custom_call.1}
  #allocation0 [shape = 'u32[]', space=smem, size = 0x4, offset = 0x4, fixed_abs, tag = 'smem constant byte address 0x4 - core index']
  #allocation1 [shape = 'u32[72,128]{1,0:T(1,128)}', space=vmem, size = 0x9000, scoped, tag = 'internal scratch']
  #allocation2 [shape = 'f32[1,1]{1,0:T(1,128)S(6)}', space=smem, size = 0x200, scoped, tag = 'scoped memory for tpu_custom_call.1']
  %s0 = inlined_call_operand.vmem [shape: s32[6,128], index: 0, kind: input, shape index: {}]
  %s1 = inlined_call_operand.vmem [shape: f32[128,64], index: 1, kind: input, shape index: {}]
  %s2 = inlined_call_operand.vmem [shape: bf16[64,128], index: 2, kind: input, shape index: {}]
  %s3 = inlined_call_operand.vmem [shape: f32[64,1], index: 3, kind: input, shape index: {}]
  %s4 = inlined_call_operand.vmem [shape: bf16[32,64], index: 4, kind: input, shape index: {}]
  %s5 = inlined_call_operand.vmem [shape: f32[32,1], index: 5, kind: input, shape index: {}]
  %s6 = inlined_call_operand.vmem [shape: f32[32,1], index: 6, kind: input, shape index: {}]
  %s7 = inlined_call_operand.<no memory space> [shape: f32[1,1], index: 7, kind: input, shape index: {}]
  %s8 = inlined_call_operand.hbm [shape: f32[1,128], index: 8, kind: output, shape index: {}]
  %s9 = sld [smem:[#allocation0]]
  $region42: #{tpu_custom_call.1} parent=0
    _
  %s11 = ssub.s32 1, %s9
  %s12 = scalar_select 0, %s11, %s9
  %13 = sst [smem:[#allocation2]] %s7
  $region1: #{tpu_custom_call.1} parent=0
    #allocation3 [shape = 'u8[512]{0}', space=vmem, size = 0x400, scoped, tag = 'output window, operand 0, single buffered']
    #allocation4 [shape = 's32[1]{0}', space=sflag, size = 0x4, scoped, tag = 'scoped memory for tpu_custom_call.1']
    %14 = vsyncpa [#allocation4], 0
    // Predicated region
    $region2: #{tpu_custom_call.1} parent=1 // pred_check
      _
    $region3: #{tpu_custom_call.1} parent=1 // pred_check_branch
      %16 = sbr.rel (0) target = $region5
    $region4: #{tpu_custom_call.1} parent=1 // pred_region
      _
    $region5: #{tpu_custom_call.1} parent=1 // pred_fallthru
      _
    // Predicated region
    $region6: #{tpu_custom_call.1} parent=1 // pred_check
      _
    $region7: #{tpu_custom_call.1} parent=1 // pred_check_branch
      %18 = sbr.rel (0) target = $region9
    $region8: #{tpu_custom_call.1} parent=1 // pred_region
      _
    $region9: #{tpu_custom_call.1} parent=1 // pred_fallthru
      _
    // Predicated region
    $region10: #{tpu_custom_call.1} parent=1 // pred_check
      _
    $region11: #{tpu_custom_call.1} parent=1 // pred_check_branch
      %20 = sbr.rel (0) target = $region13
    $region12: #{tpu_custom_call.1} parent=1 // pred_region
      _
    $region13: #{tpu_custom_call.1} parent=1 // pred_fallthru
      _
    // Predicated region
    $region14: #{tpu_custom_call.1} parent=1 // pred_check
      _
    $region15: #{tpu_custom_call.1} parent=1 // pred_check_branch
      %22 = sbr.rel (0) target = $region17
    $region16: #{tpu_custom_call.1} parent=1 // pred_region
      _
    $region17: #{tpu_custom_call.1} parent=1 // pred_fallthru
      _
    // Predicated region
    $region18: #{tpu_custom_call.1} parent=1 // pred_check
      _
    $region19: #{tpu_custom_call.1} parent=1 // pred_check_branch
      %24 = sbr.rel (0) target = $region21
    $region20: #{tpu_custom_call.1} parent=1 // pred_region
      _
    $region21: #{tpu_custom_call.1} parent=1 // pred_fallthru
      _
    // Predicated region
    $region22: #{tpu_custom_call.1} parent=1 // pred_check
      _
    $region23: #{tpu_custom_call.1} parent=1 // pred_check_branch
      %26 = sbr.rel (0) target = $region25
    $region24: #{tpu_custom_call.1} parent=1 // pred_region
      _
    $region25: #{tpu_custom_call.1} parent=1 // pred_fallthru
      _
    // Predicated region
    $region26: #{tpu_custom_call.1} parent=1 // pred_check
      _
    $region27: #{tpu_custom_call.1} parent=1 // pred_check_branch
      %28 = sbr.rel (0) target = $region29
    $region28: #{tpu_custom_call.1} parent=1 // pred_region
      _
    $region29: #{tpu_custom_call.1} parent=1 // pred_fallthru
      _
    // Predicated region
    $region30: #{tpu_custom_call.1} parent=1 // pred_check
      _
    $region31: #{tpu_custom_call.1} parent=1 // pred_check_branch
      %30 = sbr.rel (0) target = $region33
    $region32: #{tpu_custom_call.1} parent=1 // pred_region
      _
    $region33: #{tpu_custom_call.1} parent=1 // pred_fallthru
      _
    %v32 = vld [vmem:[%s1] sm:$0xff]
    %v33 = vld [vmem:[%s1 + $0x8] sm:$0xff]
    %v34 = vld [vmem:[%s1 + $0x10] sm:$0xff]
    %v35 = vld [vmem:[%s1 + $0x18] sm:$0xff]
    %v36 = vld [vmem:[%s1 + $0x20] sm:$0xff]
    %v37 = vld [vmem:[%s1 + $0x28] sm:$0xff]
    %v38 = vld [vmem:[%s1 + $0x30] sm:$0xff]
    %v39 = vld [vmem:[%s1 + $0x38] sm:$0xff]
    %v40 = vld [vmem:[%s1 + $0x40] sm:$0xff]
    %v41 = vld [vmem:[%s1 + $0x48] sm:$0xff]
    %v42 = vld [vmem:[%s1 + $0x50] sm:$0xff]
    %v43 = vld [vmem:[%s1 + $0x58] sm:$0xff]
    %v44 = vld [vmem:[%s1 + $0x60] sm:$0xff]
    %v45 = vld [vmem:[%s1 + $0x68] sm:$0xff]
    %v46 = vld [vmem:[%s1 + $0x70] sm:$0xff]
    %v47 = vld [vmem:[%s1 + $0x78] sm:$0xff]
    %v48 = vld [vmem:[%s0] sm:$0x1]
    %v49 = vlaneseq
    %v50 = vshrl.u32 %v49, 7
    %v51 = vadd.s32 %v50, 8
    %v52 = vadd.s32 %v50, 16
    %v53 = vadd.s32 %v50, 24
    %v54 = vadd.s32 %v50, 32
    %v55 = vadd.s32 %v50, 40
    %v56 = vadd.s32 %v50, 48
    %v57 = vadd.s32 %v50, 56
    %v58 = vperm.slane %v48, 0
    %vm59 = vcmp.eq.s32.totalorder %v50, %v58
    %vm60 = vcmp.eq.s32.totalorder %v51, %v58
    %vm61 = vcmp.eq.s32.totalorder %v52, %v58
    %vm62 = vcmp.eq.s32.totalorder %v53, %v58
    %vm63 = vcmp.eq.s32.totalorder %v54, %v58
    %vm64 = vcmp.eq.s32.totalorder %v55, %v58
    %vm65 = vcmp.eq.s32.totalorder %v56, %v58
    %vm66 = vcmp.eq.s32.totalorder %v57, %v58
    %v67 = vsel %vm59, 1, 0
    %v68 = vsel %vm60, 1, 0
    %v69 = vsel %vm61, 1, 0
    %v70 = vsel %vm62, 1, 0
    %v71 = vsel %vm63, 1, 0
    %v72 = vsel %vm64, 1, 0
    %v73 = vsel %vm65, 1, 0
    %v74 = vsel %vm66, 1, 0
    %v75 = vcvt.s32.f32 %v67
    %v76 = vcvt.s32.f32 %v68
    %v77 = vcvt.s32.f32 %v69
    %v78 = vcvt.s32.f32 %v70
    %v79 = vcvt.s32.f32 %v71
    %v80 = vcvt.s32.f32 %v72
    %v81 = vcvt.s32.f32 %v73
    %v82 = vcvt.s32.f32 %v74
    %vm83 = vcmask 523264
    %v85 = vsel %vm83, %v32, 0
    %v88 = vsel %vm83, %v33, 0
    %v91 = vsel %vm83, %v34, 0
    %v94 = vsel %vm83, %v35, 0
    %v97 = vsel %vm83, %v36, 0
    %v100 = vsel %vm83, %v37, 0
    %v103 = vsel %vm83, %v38, 0
    %v106 = vsel %vm83, %v39, 0
    %v109 = vsel %vm83, %v40, 0
    %v112 = vsel %vm83, %v41, 0
    %v115 = vsel %vm83, %v42, 0
    %v118 = vsel %vm83, %v43, 0
    %v121 = vsel %vm83, %v44, 0
    %v124 = vsel %vm83, %v45, 0
    %v127 = vsel %vm83, %v46, 0
    %v130 = vsel %vm83, %v47, 0
    %132 = vmatpush.msra.mxu0 0.0
    %133 = vmatpush.msra.mxu0 0.0
    %134 = vmatpush.msra.mxu0 0.0
    %135 = vmatpush.msra.mxu0 0.0
    %136 = vmatpush.msra.mxu0 0.0
    %137 = vmatpush.msra.mxu0 0.0
    %138 = vmatpush.msra.mxu0 0.0
    %139 = vmatpush.msra.mxu0 0.0
    %140 = vmatpush.msra.mxu0 %v82
    %141 = vmatpush.msra.mxu0 %v81
    %142 = vmatpush.msra.mxu0 %v80
    %143 = vmatpush.msra.mxu0 %v79
    %144 = vmatpush.msra.mxu0 %v78
    %145 = vmatpush.msra.mxu0 %v77
    %146 = vmatpush.msra.mxu0 %v76
    %147 = vmatpush.msra.mxu0 %v75
    %148 = vmatmul.f32.gmra.mxu0 %v85
    %v149 = vpop.f32.mrf.mxu0
    %v150 = vadd.f32 0.0, %v149
    %151 = vmatmul.f32.gmra.mxu0 %v88
    %v152 = vpop.f32.mrf.mxu0
    %v153 = vadd.f32 0.0, %v152
    %154 = vmatmul.f32.gmra.mxu0 %v91
    %v155 = vpop.f32.mrf.mxu0
    %v156 = vadd.f32 0.0, %v155
    %157 = vmatmul.f32.gmra.mxu0 %v94
    %v158 = vpop.f32.mrf.mxu0
    %v159 = vadd.f32 0.0, %v158
    %160 = vmatmul.f32.gmra.mxu0 %v97
    %v161 = vpop.f32.mrf.mxu0
    %v162 = vadd.f32 0.0, %v161
    %163 = vmatmul.f32.gmra.mxu0 %v100
    %v164 = vpop.f32.mrf.mxu0
    %v165 = vadd.f32 0.0, %v164
    %166 = vmatmul.f32.gmra.mxu0 %v103
    %v167 = vpop.f32.mrf.mxu0
    %v168 = vadd.f32 0.0, %v167
    %169 = vmatmul.f32.gmra.mxu0 %v106
    %v170 = vpop.f32.mrf.mxu0
    %v171 = vadd.f32 0.0, %v170
    %172 = vmatmul.f32.gmra.mxu0 %v109
    %v173 = vpop.f32.mrf.mxu0
    %v174 = vadd.f32 0.0, %v173
    %175 = vmatmul.f32.gmra.mxu0 %v112
    %v176 = vpop.f32.mrf.mxu0
    %v177 = vadd.f32 0.0, %v176
    %178 = vmatmul.f32.gmra.mxu0 %v115
    %v179 = vpop.f32.mrf.mxu0
    %v180 = vadd.f32 0.0, %v179
    %181 = vmatmul.f32.gmra.mxu0 %v118
    %v182 = vpop.f32.mrf.mxu0
    %v183 = vadd.f32 0.0, %v182
    %184 = vmatmul.f32.gmra.mxu0 %v121
    %v185 = vpop.f32.mrf.mxu0
    %v186 = vadd.f32 0.0, %v185
    %187 = vmatmul.f32.gmra.mxu0 %v124
    %v188 = vpop.f32.mrf.mxu0
    %v189 = vadd.f32 0.0, %v188
    %190 = vmatmul.f32.gmra.mxu0 %v127
    %v191 = vpop.f32.mrf.mxu0
    %v192 = vadd.f32 0.0, %v191
    %193 = vmatmul.f32.gmra.mxu0 %v130
    %v194 = vpop.f32.mrf.mxu0
    %v195 = vadd.f32 0.0, %v194
    %196 = vdwg.mxu0
    %v197 = vmul.f32 %v150, %v150
    %v198 = vmul.f32 %v153, %v153
    %v199 = vmul.f32 %v156, %v156
    %v200 = vmul.f32 %v159, %v159
    %v201 = vmul.f32 %v162, %v162
    %v202 = vmul.f32 %v165, %v165
    %v203 = vmul.f32 %v168, %v168
    %v204 = vmul.f32 %v171, %v171
    %v205 = vmul.f32 %v174, %v174
    %v206 = vmul.f32 %v177, %v177
    %v207 = vmul.f32 %v180, %v180
    %v208 = vmul.f32 %v183, %v183
    %v209 = vmul.f32 %v186, %v186
    %v210 = vmul.f32 %v189, %v189
    %v211 = vmul.f32 %v192, %v192
    %v212 = vmul.f32 %v195, %v195
    %v213 = vadd.f32 %v197, %v198
    %v214 = vadd.f32 %v213, %v199
    %v215 = vadd.f32 %v214, %v200
    %v216 = vadd.f32 %v215, %v201
    %v217 = vadd.f32 %v216, %v202
    %v218 = vadd.f32 %v217, %v203
    %v219 = vadd.f32 %v218, %v204
    %v220 = vadd.f32 %v219, %v205
    %v221 = vadd.f32 %v220, %v206
    %v222 = vadd.f32 %v221, %v207
    %v223 = vadd.f32 %v222, %v208
    %v224 = vadd.f32 %v223, %v209
    %v225 = vadd.f32 %v224, %v210
    %v226 = vadd.f32 %v225, %v211
    %v227 = vadd.f32 %v226, %v212
    %v228 = vrot.slane %v227, 4
    %v229 = vadd.f32 %v227, %v228
    %v230 = vrot.slane %v229, 2
    %v231 = vadd.f32 %v229, %v230
    %v232 = vrot.slane %v231, 1
    %v233 = vadd.f32 %v231, %v232
    %v234 = vrsqrt.pop %v233
    %v235 = vmul.f32 %v234, %v233
    %v236 = vmul.f32 %v235, %v234
    %v237 = vmul.f32 0.5, %v236
    %v238 = vsub.f32 1.5, %v237
    %v239 = vmul.f32 %v234, %v238
    %v240 = vmul.f32 %v233, %v239
    %vm241 = vcmp.eq.f32.partialorder %v233, inf
    %v242 = vsel %vm241, %v233, %v240
    %vm243 = vcmp.eq.f32.partialorder %v233, 0.0
    %v244 = vand.u32 %v233, 2147483648
    %v245 = vsel %vm243, %v244, %v242
    %v246 = vmax.f32 %v245, 1e-07
    %v247 = vrcp.pop %v246
    %v248 = vmul.f32 %v246, %v247
    %v249 = vsub.f32 1.0, %v248
    %v250 = vmul.f32 %v247, %v249
    %v251 = vadd.f32 %v247, %v250
    %vm252 = vweird.f32 %v246
    %vm253 = vweird.f32 %v247
    %vm254 = vmor %vm252, %vm253
    %v255 = vsel %vm254, %v247, %v251
    %v256 = vand.u32 2147483647, %v246
    %vm257 = vcmp.eq.f32.partialorder %v256, 8.507059e+37
    %v258 = vand.u32 %v246, 2147483648
    %v259 = vor.u32 1.1754944e-38, %v258
    %v260 = vsel %vm257, %v259, %v255
    %v261 = vmul.f32 1.0, %v260
    %v262 = vmin.f32 %v261, 1.0
    %v263 = vmul.f32 %v150, %v262
    %v264 = vmul.f32 %v153, %v262
    %v265 = vmul.f32 %v156, %v262
    %v266 = vmul.f32 %v159, %v262
    %v267 = vmul.f32 %v162, %v262
    %v268 = vmul.f32 %v165, %v262
    %v269 = vmul.f32 %v168, %v262
    %v270 = vmul.f32 %v171, %v262
    %v271 = vmul.f32 %v174, %v262
    %v272 = vmul.f32 %v177, %v262
    %v273 = vmul.f32 %v180, %v262
    %v274 = vmul.f32 %v183, %v262
    %v275 = vmul.f32 %v186, %v262
    %v276 = vmul.f32 %v189, %v262
    %v277 = vmul.f32 %v192, %v262
    %v278 = vmul.f32 %v195, %v262
    %v279 = vadd.f32 %v263, 0.0
    %v280 = vadd.f32 %v264, 0.0
    %v281 = vadd.f32 %v265, 0.0
    %v282 = vadd.f32 %v266, 0.0
    %v283 = vadd.f32 %v267, 0.0
    %v284 = vadd.f32 %v268, 0.0
    %v285 = vadd.f32 %v269, 0.0
    %v286 = vadd.f32 %v270, 0.0
    %v287 = vadd.f32 %v271, 0.0
    %v288 = vadd.f32 %v272, 0.0
    %v289 = vadd.f32 %v273, 0.0
    %v290 = vadd.f32 %v274, 0.0
    %v291 = vadd.f32 %v275, 0.0
    %v292 = vadd.f32 %v276, 0.0
    %v293 = vadd.f32 %v277, 0.0
    %v294 = vadd.f32 %v278, 0.0
    %v295 = vmul.f32 %v263, %v263
    %v296 = vmul.f32 %v264, %v264
    %v297 = vmul.f32 %v265, %v265
    %v298 = vmul.f32 %v266, %v266
    %v299 = vmul.f32 %v267, %v267
    %v300 = vmul.f32 %v268, %v268
    %v301 = vmul.f32 %v269, %v269
    %v302 = vmul.f32 %v270, %v270
    %v303 = vmul.f32 %v271, %v271
    %v304 = vmul.f32 %v272, %v272
    %v305 = vmul.f32 %v273, %v273
    %v306 = vmul.f32 %v274, %v274
    %v307 = vmul.f32 %v275, %v275
    %v308 = vmul.f32 %v276, %v276
    %v309 = vmul.f32 %v277, %v277
    %v310 = vmul.f32 %v278, %v278
    %v311 = vadd.f32 %v295, 0.0
    %v312 = vadd.f32 %v296, 0.0
    %v313 = vadd.f32 %v297, 0.0
    %v314 = vadd.f32 %v298, 0.0
    %v315 = vadd.f32 %v299, 0.0
    %v316 = vadd.f32 %v300, 0.0
    %v317 = vadd.f32 %v301, 0.0
    %v318 = vadd.f32 %v302, 0.0
    %v319 = vadd.f32 %v303, 0.0
    %v320 = vadd.f32 %v304, 0.0
    %v321 = vadd.f32 %v305, 0.0
    %v322 = vadd.f32 %v306, 0.0
    %v323 = vadd.f32 %v307, 0.0
    %v324 = vadd.f32 %v308, 0.0
    %v325 = vadd.f32 %v309, 0.0
    %v326 = vadd.f32 %v310, 0.0
    %v327 = vld [vmem:[%s0 + $0x1] sm:$0x1]
    %v328 = vperm.slane %v327, 0
    %vm329 = vcmp.eq.s32.totalorder %v50, %v328
    %vm330 = vcmp.eq.s32.totalorder %v51, %v328
    %vm331 = vcmp.eq.s32.totalorder %v52, %v328
    %vm332 = vcmp.eq.s32.totalorder %v53, %v328
    %vm333 = vcmp.eq.s32.totalorder %v54, %v328
    %vm334 = vcmp.eq.s32.totalorder %v55, %v328
    %vm335 = vcmp.eq.s32.totalorder %v56, %v328
    %vm336 = vcmp.eq.s32.totalorder %v57, %v328
    %v337 = vsel %vm329, 1, 0
    %v338 = vsel %vm330, 1, 0
    %v339 = vsel %vm331, 1, 0
    %v340 = vsel %vm332, 1, 0
    %v341 = vsel %vm333, 1, 0
    %v342 = vsel %vm334, 1, 0
    %v343 = vsel %vm335, 1, 0
    %v344 = vsel %vm336, 1, 0
    %v345 = vcvt.s32.f32 %v337
    %v346 = vcvt.s32.f32 %v338
    %v347 = vcvt.s32.f32 %v339
    %v348 = vcvt.s32.f32 %v340
    %v349 = vcvt.s32.f32 %v341
    %v350 = vcvt.s32.f32 %v342
    %v351 = vcvt.s32.f32 %v343
    %v352 = vcvt.s32.f32 %v344
    %353 = vmatpush.msra.mxu0 0.0
    %354 = vmatpush.msra.mxu0 0.0
    %355 = vmatpush.msra.mxu0 0.0
    %356 = vmatpush.msra.mxu0 0.0
    %357 = vmatpush.msra.mxu0 0.0
    %358 = vmatpush.msra.mxu0 0.0
    %359 = vmatpush.msra.mxu0 0.0
    %360 = vmatpush.msra.mxu0 0.0
    %361 = vmatpush.msra.mxu0 %v352
    %362 = vmatpush.msra.mxu0 %v351
    %363 = vmatpush.msra.mxu0 %v350
    %364 = vmatpush.msra.mxu0 %v349
    %365 = vmatpush.msra.mxu0 %v348
    %366 = vmatpush.msra.mxu0 %v347
    %367 = vmatpush.msra.mxu0 %v346
    %368 = vmatpush.msra.mxu0 %v345
    %369 = vmatmul.f32.gmra.mxu0 %v85
    %v370 = vpop.f32.mrf.mxu0
    %v371 = vadd.f32 0.0, %v370
    %372 = vmatmul.f32.gmra.mxu0 %v88
    %v373 = vpop.f32.mrf.mxu0
    %v374 = vadd.f32 0.0, %v373
    %375 = vmatmul.f32.gmra.mxu0 %v91
    %v376 = vpop.f32.mrf.mxu0
    %v377 = vadd.f32 0.0, %v376
    %378 = vmatmul.f32.gmra.mxu0 %v94
    %v379 = vpop.f32.mrf.mxu0
    %v380 = vadd.f32 0.0, %v379
    %381 = vmatmul.f32.gmra.mxu0 %v97
    %v382 = vpop.f32.mrf.mxu0
    %v383 = vadd.f32 0.0, %v382
    %384 = vmatmul.f32.gmra.mxu0 %v100
    %v385 = vpop.f32.mrf.mxu0
    %v386 = vadd.f32 0.0, %v385
    %387 = vmatmul.f32.gmra.mxu0 %v103
    %v388 = vpop.f32.mrf.mxu0
    %v389 = vadd.f32 0.0, %v388
    %390 = vmatmul.f32.gmra.mxu0 %v106
    %v391 = vpop.f32.mrf.mxu0
    %v392 = vadd.f32 0.0, %v391
    %393 = vmatmul.f32.gmra.mxu0 %v109
    %v394 = vpop.f32.mrf.mxu0
    %v395 = vadd.f32 0.0, %v394
    %396 = vmatmul.f32.gmra.mxu0 %v112
    %v397 = vpop.f32.mrf.mxu0
    %v398 = vadd.f32 0.0, %v397
    %399 = vmatmul.f32.gmra.mxu0 %v115
    %v400 = vpop.f32.mrf.mxu0
    %v401 = vadd.f32 0.0, %v400
    %402 = vmatmul.f32.gmra.mxu0 %v118
    %v403 = vpop.f32.mrf.mxu0
    %v404 = vadd.f32 0.0, %v403
    %405 = vmatmul.f32.gmra.mxu0 %v121
    %v406 = vpop.f32.mrf.mxu0
    %v407 = vadd.f32 0.0, %v406
    %408 = vmatmul.f32.gmra.mxu0 %v124
    %v409 = vpop.f32.mrf.mxu0
    %v410 = vadd.f32 0.0, %v409
    %411 = vmatmul.f32.gmra.mxu0 %v127
    %v412 = vpop.f32.mrf.mxu0
    %v413 = vadd.f32 0.0, %v412
    %414 = vmatmul.f32.gmra.mxu0 %v130
    %v415 = vpop.f32.mrf.mxu0
    %v416 = vadd.f32 0.0, %v415
    %417 = vdwg.mxu0
    %v418 = vmul.f32 %v371, %v371
    %v419 = vmul.f32 %v374, %v374
    %v420 = vmul.f32 %v377, %v377
    %v421 = vmul.f32 %v380, %v380
    %v422 = vmul.f32 %v383, %v383
    %v423 = vmul.f32 %v386, %v386
    %v424 = vmul.f32 %v389, %v389
    %v425 = vmul.f32 %v392, %v392
    %v426 = vmul.f32 %v395, %v395
    %v427 = vmul.f32 %v398, %v398
    %v428 = vmul.f32 %v401, %v401
    %v429 = vmul.f32 %v404, %v404
    %v430 = vmul.f32 %v407, %v407
    %v431 = vmul.f32 %v410, %v410
    %v432 = vmul.f32 %v413, %v413
    %v433 = vmul.f32 %v416, %v416
    %v434 = vadd.f32 %v418, %v419
    %v435 = vadd.f32 %v434, %v420
    %v436 = vadd.f32 %v435, %v421
    %v437 = vadd.f32 %v436, %v422
    %v438 = vadd.f32 %v437, %v423
    %v439 = vadd.f32 %v438, %v424
    %v440 = vadd.f32 %v439, %v425
    %v441 = vadd.f32 %v440, %v426
    %v442 = vadd.f32 %v441, %v427
    %v443 = vadd.f32 %v442, %v428
    %v444 = vadd.f32 %v443, %v429
    %v445 = vadd.f32 %v444, %v430
    %v446 = vadd.f32 %v445, %v431
    %v447 = vadd.f32 %v446, %v432
    %v448 = vadd.f32 %v447, %v433
    %v449 = vrot.slane %v448, 4
    %v450 = vadd.f32 %v448, %v449
    %v451 = vrot.slane %v450, 2
    %v452 = vadd.f32 %v450, %v451
    %v453 = vrot.slane %v452, 1
    %v454 = vadd.f32 %v452, %v453
    %v455 = vrsqrt.pop %v454
    %v456 = vmul.f32 %v455, %v454
    %v457 = vmul.f32 %v456, %v455
    %v458 = vmul.f32 0.5, %v457
    %v459 = vsub.f32 1.5, %v458
    %v460 = vmul.f32 %v455, %v459
    %v461 = vmul.f32 %v454, %v460
    %vm462 = vcmp.eq.f32.partialorder %v454, inf
    %v463 = vsel %vm462, %v454, %v461
    %vm464 = vcmp.eq.f32.partialorder %v454, 0.0
    %v465 = vand.u32 %v454, 2147483648
    %v466 = vsel %vm464, %v465, %v463
    %v467 = vmax.f32 %v466, 1e-07
    %v468 = vrcp.pop %v467
    %v469 = vmul.f32 %v467, %v468
    %v470 = vsub.f32 1.0, %v469
    %v471 = vmul.f32 %v468, %v470
    %v472 = vadd.f32 %v468, %v471
    %vm473 = vweird.f32 %v467
    %vm474 = vweird.f32 %v468
    %vm475 = vmor %vm473, %vm474
    %v476 = vsel %vm475, %v468, %v472
    %v477 = vand.u32 2147483647, %v467
    %vm478 = vcmp.eq.f32.partialorder %v477, 8.507059e+37
    %v479 = vand.u32 %v467, 2147483648
    %v480 = vor.u32 1.1754944e-38, %v479
    %v481 = vsel %vm478, %v480, %v476
    %v482 = vmul.f32 1.0, %v481
    %v483 = vmin.f32 %v482, 1.0
    %v484 = vmul.f32 %v371, %v483
    %v485 = vmul.f32 %v374, %v483
    %v486 = vmul.f32 %v377, %v483
    %v487 = vmul.f32 %v380, %v483
    %v488 = vmul.f32 %v383, %v483
    %v489 = vmul.f32 %v386, %v483
    %v490 = vmul.f32 %v389, %v483
    %v491 = vmul.f32 %v392, %v483
    %v492 = vmul.f32 %v395, %v483
    %v493 = vmul.f32 %v398, %v483
    %v494 = vmul.f32 %v401, %v483
    %v495 = vmul.f32 %v404, %v483
    %v496 = vmul.f32 %v407, %v483
    %v497 = vmul.f32 %v410, %v483
    %v498 = vmul.f32 %v413, %v483
    %v499 = vmul.f32 %v416, %v483
    %v500 = vadd.f32 %v279, %v484
    %v501 = vadd.f32 %v280, %v485
    %v502 = vadd.f32 %v281, %v486
    %v503 = vadd.f32 %v282, %v487
    %v504 = vadd.f32 %v283, %v488
    %v505 = vadd.f32 %v284, %v489
    %v506 = vadd.f32 %v285, %v490
    %v507 = vadd.f32 %v286, %v491
    %v508 = vadd.f32 %v287, %v492
    %v509 = vadd.f32 %v288, %v493
    %v510 = vadd.f32 %v289, %v494
    %v511 = vadd.f32 %v290, %v495
    %v512 = vadd.f32 %v291, %v496
    %v513 = vadd.f32 %v292, %v497
    %v514 = vadd.f32 %v293, %v498
    %v515 = vadd.f32 %v294, %v499
    %v516 = vmul.f32 %v484, %v484
    %v517 = vmul.f32 %v485, %v485
    %v518 = vmul.f32 %v486, %v486
    %v519 = vmul.f32 %v487, %v487
    %v520 = vmul.f32 %v488, %v488
    %v521 = vmul.f32 %v489, %v489
    %v522 = vmul.f32 %v490, %v490
    %v523 = vmul.f32 %v491, %v491
    %v524 = vmul.f32 %v492, %v492
    %v525 = vmul.f32 %v493, %v493
    %v526 = vmul.f32 %v494, %v494
    %v527 = vmul.f32 %v495, %v495
    %v528 = vmul.f32 %v496, %v496
    %v529 = vmul.f32 %v497, %v497
    %v530 = vmul.f32 %v498, %v498
    %v531 = vmul.f32 %v499, %v499
    %v532 = vadd.f32 %v311, %v516
    %v533 = vadd.f32 %v312, %v517
    %v534 = vadd.f32 %v313, %v518
    %v535 = vadd.f32 %v314, %v519
    %v536 = vadd.f32 %v315, %v520
    %v537 = vadd.f32 %v316, %v521
    %v538 = vadd.f32 %v317, %v522
    %v539 = vadd.f32 %v318, %v523
    %v540 = vadd.f32 %v319, %v524
    %v541 = vadd.f32 %v320, %v525
    %v542 = vadd.f32 %v321, %v526
    %v543 = vadd.f32 %v322, %v527
    %v544 = vadd.f32 %v323, %v528
    %v545 = vadd.f32 %v324, %v529
    %v546 = vadd.f32 %v325, %v530
    %v547 = vadd.f32 %v326, %v531
    %v548 = vld [vmem:[%s0 + $0x2] sm:$0x1]
    %v549 = vperm.slane %v548, 0
    %vm550 = vcmp.eq.s32.totalorder %v50, %v549
    %vm551 = vcmp.eq.s32.totalorder %v51, %v549
    %vm552 = vcmp.eq.s32.totalorder %v52, %v549
    %vm553 = vcmp.eq.s32.totalorder %v53, %v549
    %vm554 = vcmp.eq.s32.totalorder %v54, %v549
    %vm555 = vcmp.eq.s32.totalorder %v55, %v549
    %vm556 = vcmp.eq.s32.totalorder %v56, %v549
    %vm557 = vcmp.eq.s32.totalorder %v57, %v549
    %v558 = vsel %vm550, 1, 0
    %v559 = vsel %vm551, 1, 0
    %v560 = vsel %vm552, 1, 0
    %v561 = vsel %vm553, 1, 0
    %v562 = vsel %vm554, 1, 0
    %v563 = vsel %vm555, 1, 0
    %v564 = vsel %vm556, 1, 0
    %v565 = vsel %vm557, 1, 0
    %v566 = vcvt.s32.f32 %v558
    %v567 = vcvt.s32.f32 %v559
    %v568 = vcvt.s32.f32 %v560
    %v569 = vcvt.s32.f32 %v561
    %v570 = vcvt.s32.f32 %v562
    %v571 = vcvt.s32.f32 %v563
    %v572 = vcvt.s32.f32 %v564
    %v573 = vcvt.s32.f32 %v565
    %574 = vmatpush.msra.mxu0 0.0
    %575 = vmatpush.msra.mxu0 0.0
    %576 = vmatpush.msra.mxu0 0.0
    %577 = vmatpush.msra.mxu0 0.0
    %578 = vmatpush.msra.mxu0 0.0
    %579 = vmatpush.msra.mxu0 0.0
    %580 = vmatpush.msra.mxu0 0.0
    %581 = vmatpush.msra.mxu0 0.0
    %582 = vmatpush.msra.mxu0 %v573
    %583 = vmatpush.msra.mxu0 %v572
    %584 = vmatpush.msra.mxu0 %v571
    %585 = vmatpush.msra.mxu0 %v570
    %586 = vmatpush.msra.mxu0 %v569
    %587 = vmatpush.msra.mxu0 %v568
    %588 = vmatpush.msra.mxu0 %v567
    %589 = vmatpush.msra.mxu0 %v566
    %590 = vmatmul.f32.gmra.mxu0 %v85
    %v591 = vpop.f32.mrf.mxu0
    %v592 = vadd.f32 0.0, %v591
    %593 = vmatmul.f32.gmra.mxu0 %v88
    %v594 = vpop.f32.mrf.mxu0
    %v595 = vadd.f32 0.0, %v594
    %596 = vmatmul.f32.gmra.mxu0 %v91
    %v597 = vpop.f32.mrf.mxu0
    %v598 = vadd.f32 0.0, %v597
    %599 = vmatmul.f32.gmra.mxu0 %v94
    %v600 = vpop.f32.mrf.mxu0
    %v601 = vadd.f32 0.0, %v600
    %602 = vmatmul.f32.gmra.mxu0 %v97
    %v603 = vpop.f32.mrf.mxu0
    %v604 = vadd.f32 0.0, %v603
    %605 = vmatmul.f32.gmra.mxu0 %v100
    %v606 = vpop.f32.mrf.mxu0
    %v607 = vadd.f32 0.0, %v606
    %608 = vmatmul.f32.gmra.mxu0 %v103
    %v609 = vpop.f32.mrf.mxu0
    %v610 = vadd.f32 0.0, %v609
    %611 = vmatmul.f32.gmra.mxu0 %v106
    %v612 = vpop.f32.mrf.mxu0
    %v613 = vadd.f32 0.0, %v612
    %614 = vmatmul.f32.gmra.mxu0 %v109
    %v615 = vpop.f32.mrf.mxu0
    %v616 = vadd.f32 0.0, %v615
    %617 = vmatmul.f32.gmra.mxu0 %v112
    %v618 = vpop.f32.mrf.mxu0
    %v619 = vadd.f32 0.0, %v618
    %620 = vmatmul.f32.gmra.mxu0 %v115
    %v621 = vpop.f32.mrf.mxu0
    %v622 = vadd.f32 0.0, %v621
    %623 = vmatmul.f32.gmra.mxu0 %v118
    %v624 = vpop.f32.mrf.mxu0
    %v625 = vadd.f32 0.0, %v624
    %626 = vmatmul.f32.gmra.mxu0 %v121
    %v627 = vpop.f32.mrf.mxu0
    %v628 = vadd.f32 0.0, %v627
    %629 = vmatmul.f32.gmra.mxu0 %v124
    %v630 = vpop.f32.mrf.mxu0
    %v631 = vadd.f32 0.0, %v630
    %632 = vmatmul.f32.gmra.mxu0 %v127
    %v633 = vpop.f32.mrf.mxu0
    %v634 = vadd.f32 0.0, %v633
    %635 = vmatmul.f32.gmra.mxu0 %v130
    %v636 = vpop.f32.mrf.mxu0
    %v637 = vadd.f32 0.0, %v636
    %638 = vdwg.mxu0
    %v639 = vmul.f32 %v592, %v592
    %v640 = vmul.f32 %v595, %v595
    %v641 = vmul.f32 %v598, %v598
    %v642 = vmul.f32 %v601, %v601
    %v643 = vmul.f32 %v604, %v604
    %v644 = vmul.f32 %v607, %v607
    %v645 = vmul.f32 %v610, %v610
    %v646 = vmul.f32 %v613, %v613
    %v647 = vmul.f32 %v616, %v616
    %v648 = vmul.f32 %v619, %v619
    %v649 = vmul.f32 %v622, %v622
    %v650 = vmul.f32 %v625, %v625
    %v651 = vmul.f32 %v628, %v628
    %v652 = vmul.f32 %v631, %v631
    %v653 = vmul.f32 %v634, %v634
    %v654 = vmul.f32 %v637, %v637
    %v655 = vadd.f32 %v639, %v640
    %v656 = vadd.f32 %v655, %v641
    %v657 = vadd.f32 %v656, %v642
    %v658 = vadd.f32 %v657, %v643
    %v659 = vadd.f32 %v658, %v644
    %v660 = vadd.f32 %v659, %v645
    %v661 = vadd.f32 %v660, %v646
    %v662 = vadd.f32 %v661, %v647
    %v663 = vadd.f32 %v662, %v648
    %v664 = vadd.f32 %v663, %v649
    %v665 = vadd.f32 %v664, %v650
    %v666 = vadd.f32 %v665, %v651
    %v667 = vadd.f32 %v666, %v652
    %v668 = vadd.f32 %v667, %v653
    %v669 = vadd.f32 %v668, %v654
    %v670 = vrot.slane %v669, 4
    %v671 = vadd.f32 %v669, %v670
    %v672 = vrot.slane %v671, 2
    %v673 = vadd.f32 %v671, %v672
    %v674 = vrot.slane %v673, 1
    %v675 = vadd.f32 %v673, %v674
    %v676 = vrsqrt.pop %v675
    %v677 = vmul.f32 %v676, %v675
    %v678 = vmul.f32 %v677, %v676
    %v679 = vmul.f32 0.5, %v678
    %v680 = vsub.f32 1.5, %v679
    %v681 = vmul.f32 %v676, %v680
    %v682 = vmul.f32 %v675, %v681
    %vm683 = vcmp.eq.f32.partialorder %v675, inf
    %v684 = vsel %vm683, %v675, %v682
    %vm685 = vcmp.eq.f32.partialorder %v675, 0.0
    %v686 = vand.u32 %v675, 2147483648
    %v687 = vsel %vm685, %v686, %v684
    %v688 = vmax.f32 %v687, 1e-07
    %v689 = vrcp.pop %v688
    %v690 = vmul.f32 %v688, %v689
    %v691 = vsub.f32 1.0, %v690
    %v692 = vmul.f32 %v689, %v691
    %v693 = vadd.f32 %v689, %v692
    %vm694 = vweird.f32 %v688
    %vm695 = vweird.f32 %v689
    %vm696 = vmor %vm694, %vm695
    %v697 = vsel %vm696, %v689, %v693
    %v698 = vand.u32 2147483647, %v688
    %vm699 = vcmp.eq.f32.partialorder %v698, 8.507059e+37
    %v700 = vand.u32 %v688, 2147483648
    %v701 = vor.u32 1.1754944e-38, %v700
    %v702 = vsel %vm699, %v701, %v697
    %v703 = vmul.f32 1.0, %v702
    %v704 = vmin.f32 %v703, 1.0
    %v705 = vmul.f32 %v592, %v704
    %v706 = vmul.f32 %v595, %v704
    %v707 = vmul.f32 %v598, %v704
    %v708 = vmul.f32 %v601, %v704
    %v709 = vmul.f32 %v604, %v704
    %v710 = vmul.f32 %v607, %v704
    %v711 = vmul.f32 %v610, %v704
    %v712 = vmul.f32 %v613, %v704
    %v713 = vmul.f32 %v616, %v704
    %v714 = vmul.f32 %v619, %v704
    %v715 = vmul.f32 %v622, %v704
    %v716 = vmul.f32 %v625, %v704
    %v717 = vmul.f32 %v628, %v704
    %v718 = vmul.f32 %v631, %v704
    %v719 = vmul.f32 %v634, %v704
    %v720 = vmul.f32 %v637, %v704
    %v721 = vadd.f32 %v500, %v705
    %v722 = vadd.f32 %v501, %v706
    %v723 = vadd.f32 %v502, %v707
    %v724 = vadd.f32 %v503, %v708
    %v725 = vadd.f32 %v504, %v709
    %v726 = vadd.f32 %v505, %v710
    %v727 = vadd.f32 %v506, %v711
    %v728 = vadd.f32 %v507, %v712
    %v729 = vadd.f32 %v508, %v713
    %v730 = vadd.f32 %v509, %v714
    %v731 = vadd.f32 %v510, %v715
    %v732 = vadd.f32 %v511, %v716
    %v733 = vadd.f32 %v512, %v717
    %v734 = vadd.f32 %v513, %v718
    %v735 = vadd.f32 %v514, %v719
    %v736 = vadd.f32 %v515, %v720
    %v737 = vmul.f32 %v705, %v705
    %v738 = vmul.f32 %v706, %v706
    %v739 = vmul.f32 %v707, %v707
    %v740 = vmul.f32 %v708, %v708
    %v741 = vmul.f32 %v709, %v709
    %v742 = vmul.f32 %v710, %v710
    %v743 = vmul.f32 %v711, %v711
    %v744 = vmul.f32 %v712, %v712
    %v745 = vmul.f32 %v713, %v713
    %v746 = vmul.f32 %v714, %v714
    %v747 = vmul.f32 %v715, %v715
    %v748 = vmul.f32 %v716, %v716
    %v749 = vmul.f32 %v717, %v717
    %v750 = vmul.f32 %v718, %v718
    %v751 = vmul.f32 %v719, %v719
    %v752 = vmul.f32 %v720, %v720
    %v753 = vadd.f32 %v532, %v737
    %v754 = vadd.f32 %v533, %v738
    %v755 = vadd.f32 %v534, %v739
    %v756 = vadd.f32 %v535, %v740
    %v757 = vadd.f32 %v536, %v741
    %v758 = vadd.f32 %v537, %v742
    %v759 = vadd.f32 %v538, %v743
    %v760 = vadd.f32 %v539, %v744
    %v761 = vadd.f32 %v540, %v745
    %v762 = vadd.f32 %v541, %v746
    %v763 = vadd.f32 %v542, %v747
    %v764 = vadd.f32 %v543, %v748
    %v765 = vadd.f32 %v544, %v749
    %v766 = vadd.f32 %v545, %v750
    %v767 = vadd.f32 %v546, %v751
    %v768 = vadd.f32 %v547, %v752
    %v769 = vld [vmem:[%s0 + $0x3] sm:$0x1]
    %v770 = vperm.slane %v769, 0
    %vm771 = vcmp.eq.s32.totalorder %v50, %v770
    %vm772 = vcmp.eq.s32.totalorder %v51, %v770
    %vm773 = vcmp.eq.s32.totalorder %v52, %v770
    %vm774 = vcmp.eq.s32.totalorder %v53, %v770
    %vm775 = vcmp.eq.s32.totalorder %v54, %v770
    %vm776 = vcmp.eq.s32.totalorder %v55, %v770
    %vm777 = vcmp.eq.s32.totalorder %v56, %v770
    %vm778 = vcmp.eq.s32.totalorder %v57, %v770
    %v779 = vsel %vm771, 1, 0
    %v780 = vsel %vm772, 1, 0
    %v781 = vsel %vm773, 1, 0
    %v782 = vsel %vm774, 1, 0
    %v783 = vsel %vm775, 1, 0
    %v784 = vsel %vm776, 1, 0
    %v785 = vsel %vm777, 1, 0
    %v786 = vsel %vm778, 1, 0
    %v787 = vcvt.s32.f32 %v779
    %v788 = vcvt.s32.f32 %v780
    %v789 = vcvt.s32.f32 %v781
    %v790 = vcvt.s32.f32 %v782
    %v791 = vcvt.s32.f32 %v783
    %v792 = vcvt.s32.f32 %v784
    %v793 = vcvt.s32.f32 %v785
    %v794 = vcvt.s32.f32 %v786
    %795 = vmatpush.msra.mxu0 0.0
    %796 = vmatpush.msra.mxu0 0.0
    %797 = vmatpush.msra.mxu0 0.0
    %798 = vmatpush.msra.mxu0 0.0
    %799 = vmatpush.msra.mxu0 0.0
    %800 = vmatpush.msra.mxu0 0.0
    %801 = vmatpush.msra.mxu0 0.0
    %802 = vmatpush.msra.mxu0 0.0
    %803 = vmatpush.msra.mxu0 %v794
    %804 = vmatpush.msra.mxu0 %v793
    %805 = vmatpush.msra.mxu0 %v792
    %806 = vmatpush.msra.mxu0 %v791
    %807 = vmatpush.msra.mxu0 %v790
    %808 = vmatpush.msra.mxu0 %v789
    %809 = vmatpush.msra.mxu0 %v788
    %810 = vmatpush.msra.mxu0 %v787
    %811 = vmatmul.f32.gmra.mxu0 %v85
    %v812 = vpop.f32.mrf.mxu0
    %v813 = vadd.f32 0.0, %v812
    %814 = vmatmul.f32.gmra.mxu0 %v88
    %v815 = vpop.f32.mrf.mxu0
    %v816 = vadd.f32 0.0, %v815
    %817 = vmatmul.f32.gmra.mxu0 %v91
    %v818 = vpop.f32.mrf.mxu0
    %v819 = vadd.f32 0.0, %v818
    %820 = vmatmul.f32.gmra.mxu0 %v94
    %v821 = vpop.f32.mrf.mxu0
    %v822 = vadd.f32 0.0, %v821
    %823 = vmatmul.f32.gmra.mxu0 %v97
    %v824 = vpop.f32.mrf.mxu0
    %v825 = vadd.f32 0.0, %v824
    %826 = vmatmul.f32.gmra.mxu0 %v100
    %v827 = vpop.f32.mrf.mxu0
    %v828 = vadd.f32 0.0, %v827
    %829 = vmatmul.f32.gmra.mxu0 %v103
    %v830 = vpop.f32.mrf.mxu0
    %v831 = vadd.f32 0.0, %v830
    %832 = vmatmul.f32.gmra.mxu0 %v106
    %v833 = vpop.f32.mrf.mxu0
    %v834 = vadd.f32 0.0, %v833
    %835 = vmatmul.f32.gmra.mxu0 %v109
    %v836 = vpop.f32.mrf.mxu0
    %v837 = vadd.f32 0.0, %v836
    %838 = vmatmul.f32.gmra.mxu0 %v112
    %v839 = vpop.f32.mrf.mxu0
    %v840 = vadd.f32 0.0, %v839
    %841 = vmatmul.f32.gmra.mxu0 %v115
    %v842 = vpop.f32.mrf.mxu0
    %v843 = vadd.f32 0.0, %v842
    %844 = vmatmul.f32.gmra.mxu0 %v118
    %v845 = vpop.f32.mrf.mxu0
    %v846 = vadd.f32 0.0, %v845
    %847 = vmatmul.f32.gmra.mxu0 %v121
    %v848 = vpop.f32.mrf.mxu0
    %v849 = vadd.f32 0.0, %v848
    %850 = vmatmul.f32.gmra.mxu0 %v124
    %v851 = vpop.f32.mrf.mxu0
    %v852 = vadd.f32 0.0, %v851
    %853 = vmatmul.f32.gmra.mxu0 %v127
    %v854 = vpop.f32.mrf.mxu0
    %v855 = vadd.f32 0.0, %v854
    %856 = vmatmul.f32.gmra.mxu0 %v130
    %v857 = vpop.f32.mrf.mxu0
    %v858 = vadd.f32 0.0, %v857
    %859 = vdwg.mxu0
    %v860 = vmul.f32 %v813, %v813
    %v861 = vmul.f32 %v816, %v816
    %v862 = vmul.f32 %v819, %v819
    %v863 = vmul.f32 %v822, %v822
    %v864 = vmul.f32 %v825, %v825
    %v865 = vmul.f32 %v828, %v828
    %v866 = vmul.f32 %v831, %v831
    %v867 = vmul.f32 %v834, %v834
    %v868 = vmul.f32 %v837, %v837
    %v869 = vmul.f32 %v840, %v840
    %v870 = vmul.f32 %v843, %v843
    %v871 = vmul.f32 %v846, %v846
    %v872 = vmul.f32 %v849, %v849
    %v873 = vmul.f32 %v852, %v852
    %v874 = vmul.f32 %v855, %v855
    %v875 = vmul.f32 %v858, %v858
    %v876 = vadd.f32 %v860, %v861
    %v877 = vadd.f32 %v876, %v862
    %v878 = vadd.f32 %v877, %v863
    %v879 = vadd.f32 %v878, %v864
    %v880 = vadd.f32 %v879, %v865
    %v881 = vadd.f32 %v880, %v866
    %v882 = vadd.f32 %v881, %v867
    %v883 = vadd.f32 %v882, %v868
    %v884 = vadd.f32 %v883, %v869
    %v885 = vadd.f32 %v884, %v870
    %v886 = vadd.f32 %v885, %v871
    %v887 = vadd.f32 %v886, %v872
    %v888 = vadd.f32 %v887, %v873
    %v889 = vadd.f32 %v888, %v874
    %v890 = vadd.f32 %v889, %v875
    %v891 = vrot.slane %v890, 4
    %v892 = vadd.f32 %v890, %v891
    %v893 = vrot.slane %v892, 2
    %v894 = vadd.f32 %v892, %v893
    %v895 = vrot.slane %v894, 1
    %v896 = vadd.f32 %v894, %v895
    %v897 = vrsqrt.pop %v896
    %v898 = vmul.f32 %v897, %v896
    %v899 = vmul.f32 %v898, %v897
    %v900 = vmul.f32 0.5, %v899
    %v901 = vsub.f32 1.5, %v900
    %v902 = vmul.f32 %v897, %v901
    %v903 = vmul.f32 %v896, %v902
    %vm904 = vcmp.eq.f32.partialorder %v896, inf
    %v905 = vsel %vm904, %v896, %v903
    %vm906 = vcmp.eq.f32.partialorder %v896, 0.0
    %v907 = vand.u32 %v896, 2147483648
    %v908 = vsel %vm906, %v907, %v905
    %v909 = vmax.f32 %v908, 1e-07
    %v910 = vrcp.pop %v909
    %v911 = vmul.f32 %v909, %v910
    %v912 = vsub.f32 1.0, %v911
    %v913 = vmul.f32 %v910, %v912
    %v914 = vadd.f32 %v910, %v913
    %vm915 = vweird.f32 %v909
    %vm916 = vweird.f32 %v910
    %vm917 = vmor %vm915, %vm916
    %v918 = vsel %vm917, %v910, %v914
    %v919 = vand.u32 2147483647, %v909
    %vm920 = vcmp.eq.f32.partialorder %v919, 8.507059e+37
    %v921 = vand.u32 %v909, 2147483648
    %v922 = vor.u32 1.1754944e-38, %v921
    %v923 = vsel %vm920, %v922, %v918
    %v924 = vmul.f32 1.0, %v923
    %v925 = vmin.f32 %v924, 1.0
    %v926 = vmul.f32 %v813, %v925
    %v927 = vmul.f32 %v816, %v925
    %v928 = vmul.f32 %v819, %v925
    %v929 = vmul.f32 %v822, %v925
    %v930 = vmul.f32 %v825, %v925
    %v931 = vmul.f32 %v828, %v925
    %v932 = vmul.f32 %v831, %v925
    %v933 = vmul.f32 %v834, %v925
    %v934 = vmul.f32 %v837, %v925
    %v935 = vmul.f32 %v840, %v925
    %v936 = vmul.f32 %v843, %v925
    %v937 = vmul.f32 %v846, %v925
    %v938 = vmul.f32 %v849, %v925
    %v939 = vmul.f32 %v852, %v925
    %v940 = vmul.f32 %v855, %v925
    %v941 = vmul.f32 %v858, %v925
    %v942 = vadd.f32 %v721, %v926
    %v943 = vadd.f32 %v722, %v927
    %v944 = vadd.f32 %v723, %v928
    %v945 = vadd.f32 %v724, %v929
    %v946 = vadd.f32 %v725, %v930
    %v947 = vadd.f32 %v726, %v931
    %v948 = vadd.f32 %v727, %v932
    %v949 = vadd.f32 %v728, %v933
    %v950 = vadd.f32 %v729, %v934
    %v951 = vadd.f32 %v730, %v935
    %v952 = vadd.f32 %v731, %v936
    %v953 = vadd.f32 %v732, %v937
    %v954 = vadd.f32 %v733, %v938
    %v955 = vadd.f32 %v734, %v939
    %v956 = vadd.f32 %v735, %v940
    %v957 = vadd.f32 %v736, %v941
    %v958 = vmul.f32 %v926, %v926
    %v959 = vmul.f32 %v927, %v927
    %v960 = vmul.f32 %v928, %v928
    %v961 = vmul.f32 %v929, %v929
    %v962 = vmul.f32 %v930, %v930
    %v963 = vmul.f32 %v931, %v931
    %v964 = vmul.f32 %v932, %v932
    %v965 = vmul.f32 %v933, %v933
    %v966 = vmul.f32 %v934, %v934
    %v967 = vmul.f32 %v935, %v935
    %v968 = vmul.f32 %v936, %v936
    %v969 = vmul.f32 %v937, %v937
    %v970 = vmul.f32 %v938, %v938
    %v971 = vmul.f32 %v939, %v939
    %v972 = vmul.f32 %v940, %v940
    %v973 = vmul.f32 %v941, %v941
    %v974 = vadd.f32 %v753, %v958
    %v975 = vadd.f32 %v754, %v959
    %v976 = vadd.f32 %v755, %v960
    %v977 = vadd.f32 %v756, %v961
    %v978 = vadd.f32 %v757, %v962
    %v979 = vadd.f32 %v758, %v963
    %v980 = vadd.f32 %v759, %v964
    %v981 = vadd.f32 %v760, %v965
    %v982 = vadd.f32 %v761, %v966
    %v983 = vadd.f32 %v762, %v967
    %v984 = vadd.f32 %v763, %v968
    %v985 = vadd.f32 %v764, %v969
    %v986 = vadd.f32 %v765, %v970
    %v987 = vadd.f32 %v766, %v971
    %v988 = vadd.f32 %v767, %v972
    %v989 = vadd.f32 %v768, %v973
    %v990 = vld [vmem:[%s0 + $0x4] sm:$0x1]
    %v991 = vperm.slane %v990, 0
    %vm992 = vcmp.eq.s32.totalorder %v50, %v991
    %vm993 = vcmp.eq.s32.totalorder %v51, %v991
    %vm994 = vcmp.eq.s32.totalorder %v52, %v991
    %vm995 = vcmp.eq.s32.totalorder %v53, %v991
    %vm996 = vcmp.eq.s32.totalorder %v54, %v991
    %vm997 = vcmp.eq.s32.totalorder %v55, %v991
    %vm998 = vcmp.eq.s32.totalorder %v56, %v991
    %vm999 = vcmp.eq.s32.totalorder %v57, %v991
    %v1000 = vsel %vm992, 1, 0
    %v1001 = vsel %vm993, 1, 0
    %v1002 = vsel %vm994, 1, 0
    %v1003 = vsel %vm995, 1, 0
    %v1004 = vsel %vm996, 1, 0
    %v1005 = vsel %vm997, 1, 0
    %v1006 = vsel %vm998, 1, 0
    %v1007 = vsel %vm999, 1, 0
    %v1008 = vcvt.s32.f32 %v1000
    %v1009 = vcvt.s32.f32 %v1001
    %v1010 = vcvt.s32.f32 %v1002
    %v1011 = vcvt.s32.f32 %v1003
    %v1012 = vcvt.s32.f32 %v1004
    %v1013 = vcvt.s32.f32 %v1005
    %v1014 = vcvt.s32.f32 %v1006
    %v1015 = vcvt.s32.f32 %v1007
    %1016 = vmatpush.msra.mxu0 0.0
    %1017 = vmatpush.msra.mxu0 0.0
    %1018 = vmatpush.msra.mxu0 0.0
    %1019 = vmatpush.msra.mxu0 0.0
    %1020 = vmatpush.msra.mxu0 0.0
    %1021 = vmatpush.msra.mxu0 0.0
    %1022 = vmatpush.msra.mxu0 0.0
    %1023 = vmatpush.msra.mxu0 0.0
    %1024 = vmatpush.msra.mxu0 %v1015
    %1025 = vmatpush.msra.mxu0 %v1014
    %1026 = vmatpush.msra.mxu0 %v1013
    %1027 = vmatpush.msra.mxu0 %v1012
    %1028 = vmatpush.msra.mxu0 %v1011
    %1029 = vmatpush.msra.mxu0 %v1010
    %1030 = vmatpush.msra.mxu0 %v1009
    %1031 = vmatpush.msra.mxu0 %v1008
    %1032 = vmatmul.f32.gmra.mxu0 %v85
    %v1033 = vpop.f32.mrf.mxu0
    %v1034 = vadd.f32 0.0, %v1033
    %1035 = vmatmul.f32.gmra.mxu0 %v88
    %v1036 = vpop.f32.mrf.mxu0
    %v1037 = vadd.f32 0.0, %v1036
    %1038 = vmatmul.f32.gmra.mxu0 %v91
    %v1039 = vpop.f32.mrf.mxu0
    %v1040 = vadd.f32 0.0, %v1039
    %1041 = vmatmul.f32.gmra.mxu0 %v94
    %v1042 = vpop.f32.mrf.mxu0
    %v1043 = vadd.f32 0.0, %v1042
    %1044 = vmatmul.f32.gmra.mxu0 %v97
    %v1045 = vpop.f32.mrf.mxu0
    %v1046 = vadd.f32 0.0, %v1045
    %1047 = vmatmul.f32.gmra.mxu0 %v100
    %v1048 = vpop.f32.mrf.mxu0
    %v1049 = vadd.f32 0.0, %v1048
    %1050 = vmatmul.f32.gmra.mxu0 %v103
    %v1051 = vpop.f32.mrf.mxu0
    %v1052 = vadd.f32 0.0, %v1051
    %1053 = vmatmul.f32.gmra.mxu0 %v106
    %v1054 = vpop.f32.mrf.mxu0
    %v1055 = vadd.f32 0.0, %v1054
    %1056 = vmatmul.f32.gmra.mxu0 %v109
    %v1057 = vpop.f32.mrf.mxu0
    %v1058 = vadd.f32 0.0, %v1057
    %1059 = vmatmul.f32.gmra.mxu0 %v112
    %v1060 = vpop.f32.mrf.mxu0
    %v1061 = vadd.f32 0.0, %v1060
    %1062 = vmatmul.f32.gmra.mxu0 %v115
    %v1063 = vpop.f32.mrf.mxu0
    %v1064 = vadd.f32 0.0, %v1063
    %1065 = vmatmul.f32.gmra.mxu0 %v118
    %v1066 = vpop.f32.mrf.mxu0
    %v1067 = vadd.f32 0.0, %v1066
    %1068 = vmatmul.f32.gmra.mxu0 %v121
    %v1069 = vpop.f32.mrf.mxu0
    %v1070 = vadd.f32 0.0, %v1069
    %1071 = vmatmul.f32.gmra.mxu0 %v124
    %v1072 = vpop.f32.mrf.mxu0
    %v1073 = vadd.f32 0.0, %v1072
    %1074 = vmatmul.f32.gmra.mxu0 %v127
    %v1075 = vpop.f32.mrf.mxu0
    %v1076 = vadd.f32 0.0, %v1075
    %1077 = vmatmul.f32.gmra.mxu0 %v130
    %v1078 = vpop.f32.mrf.mxu0
    %v1079 = vadd.f32 0.0, %v1078
    %1080 = vdwg.mxu0
    %v1081 = vmul.f32 %v1034, %v1034
    %v1082 = vmul.f32 %v1037, %v1037
    %v1083 = vmul.f32 %v1040, %v1040
    %v1084 = vmul.f32 %v1043, %v1043
    %v1085 = vmul.f32 %v1046, %v1046
    %v1086 = vmul.f32 %v1049, %v1049
    %v1087 = vmul.f32 %v1052, %v1052
    %v1088 = vmul.f32 %v1055, %v1055
    %v1089 = vmul.f32 %v1058, %v1058
    %v1090 = vmul.f32 %v1061, %v1061
    %v1091 = vmul.f32 %v1064, %v1064
    %v1092 = vmul.f32 %v1067, %v1067
    %v1093 = vmul.f32 %v1070, %v1070
    %v1094 = vmul.f32 %v1073, %v1073
    %v1095 = vmul.f32 %v1076, %v1076
    %v1096 = vmul.f32 %v1079, %v1079
    %v1097 = vadd.f32 %v1081, %v1082
    %v1098 = vadd.f32 %v1097, %v1083
    %v1099 = vadd.f32 %v1098, %v1084
    %v1100 = vadd.f32 %v1099, %v1085
    %v1101 = vadd.f32 %v1100, %v1086
    %v1102 = vadd.f32 %v1101, %v1087
    %v1103 = vadd.f32 %v1102, %v1088
    %v1104 = vadd.f32 %v1103, %v1089
    %v1105 = vadd.f32 %v1104, %v1090
    %v1106 = vadd.f32 %v1105, %v1091
    %v1107 = vadd.f32 %v1106, %v1092
    %v1108 = vadd.f32 %v1107, %v1093
    %v1109 = vadd.f32 %v1108, %v1094
    %v1110 = vadd.f32 %v1109, %v1095
    %v1111 = vadd.f32 %v1110, %v1096
    %v1112 = vrot.slane %v1111, 4
    %v1113 = vadd.f32 %v1111, %v1112
    %v1114 = vrot.slane %v1113, 2
    %v1115 = vadd.f32 %v1113, %v1114
    %v1116 = vrot.slane %v1115, 1
    %v1117 = vadd.f32 %v1115, %v1116
    %v1118 = vrsqrt.pop %v1117
    %v1119 = vmul.f32 %v1118, %v1117
    %v1120 = vmul.f32 %v1119, %v1118
    %v1121 = vmul.f32 0.5, %v1120
    %v1122 = vsub.f32 1.5, %v1121
    %v1123 = vmul.f32 %v1118, %v1122
    %v1124 = vmul.f32 %v1117, %v1123
    %vm1125 = vcmp.eq.f32.partialorder %v1117, inf
    %v1126 = vsel %vm1125, %v1117, %v1124
    %vm1127 = vcmp.eq.f32.partialorder %v1117, 0.0
    %v1128 = vand.u32 %v1117, 2147483648
    %v1129 = vsel %vm1127, %v1128, %v1126
    %v1130 = vmax.f32 %v1129, 1e-07
    %v1131 = vrcp.pop %v1130
    %v1132 = vmul.f32 %v1130, %v1131
    %v1133 = vsub.f32 1.0, %v1132
    %v1134 = vmul.f32 %v1131, %v1133
    %v1135 = vadd.f32 %v1131, %v1134
    %vm1136 = vweird.f32 %v1130
    %vm1137 = vweird.f32 %v1131
    %vm1138 = vmor %vm1136, %vm1137
    %v1139 = vsel %vm1138, %v1131, %v1135
    %v1140 = vand.u32 2147483647, %v1130
    %vm1141 = vcmp.eq.f32.partialorder %v1140, 8.507059e+37
    %v1142 = vand.u32 %v1130, 2147483648
    %v1143 = vor.u32 1.1754944e-38, %v1142
    %v1144 = vsel %vm1141, %v1143, %v1139
    %v1145 = vmul.f32 1.0, %v1144
    %v1146 = vmin.f32 %v1145, 1.0
    %v1147 = vmul.f32 %v1034, %v1146
    %v1148 = vmul.f32 %v1037, %v1146
    %v1149 = vmul.f32 %v1040, %v1146
    %v1150 = vmul.f32 %v1043, %v1146
    %v1151 = vmul.f32 %v1046, %v1146
    %v1152 = vmul.f32 %v1049, %v1146
    %v1153 = vmul.f32 %v1052, %v1146
    %v1154 = vmul.f32 %v1055, %v1146
    %v1155 = vmul.f32 %v1058, %v1146
    %v1156 = vmul.f32 %v1061, %v1146
    %v1157 = vmul.f32 %v1064, %v1146
    %v1158 = vmul.f32 %v1067, %v1146
    %v1159 = vmul.f32 %v1070, %v1146
    %v1160 = vmul.f32 %v1073, %v1146
    %v1161 = vmul.f32 %v1076, %v1146
    %v1162 = vmul.f32 %v1079, %v1146
    %v1163 = vadd.f32 %v942, %v1147
    %v1164 = vadd.f32 %v943, %v1148
    %v1165 = vadd.f32 %v944, %v1149
    %v1166 = vadd.f32 %v945, %v1150
    %v1167 = vadd.f32 %v946, %v1151
    %v1168 = vadd.f32 %v947, %v1152
    %v1169 = vadd.f32 %v948, %v1153
    %v1170 = vadd.f32 %v949, %v1154
    %v1171 = vadd.f32 %v950, %v1155
    %v1172 = vadd.f32 %v951, %v1156
    %v1173 = vadd.f32 %v952, %v1157
    %v1174 = vadd.f32 %v953, %v1158
    %v1175 = vadd.f32 %v954, %v1159
    %v1176 = vadd.f32 %v955, %v1160
    %v1177 = vadd.f32 %v956, %v1161
    %v1178 = vadd.f32 %v957, %v1162
    %v1179 = vmul.f32 %v1147, %v1147
    %v1180 = vmul.f32 %v1148, %v1148
    %v1181 = vmul.f32 %v1149, %v1149
    %v1182 = vmul.f32 %v1150, %v1150
    %v1183 = vmul.f32 %v1151, %v1151
    %v1184 = vmul.f32 %v1152, %v1152
    %v1185 = vmul.f32 %v1153, %v1153
    %v1186 = vmul.f32 %v1154, %v1154
    %v1187 = vmul.f32 %v1155, %v1155
    %v1188 = vmul.f32 %v1156, %v1156
    %v1189 = vmul.f32 %v1157, %v1157
    %v1190 = vmul.f32 %v1158, %v1158
    %v1191 = vmul.f32 %v1159, %v1159
    %v1192 = vmul.f32 %v1160, %v1160
    %v1193 = vmul.f32 %v1161, %v1161
    %v1194 = vmul.f32 %v1162, %v1162
    %v1195 = vadd.f32 %v974, %v1179
    %v1196 = vadd.f32 %v975, %v1180
    %v1197 = vadd.f32 %v976, %v1181
    %v1198 = vadd.f32 %v977, %v1182
    %v1199 = vadd.f32 %v978, %v1183
    %v1200 = vadd.f32 %v979, %v1184
    %v1201 = vadd.f32 %v980, %v1185
    %v1202 = vadd.f32 %v981, %v1186
    %v1203 = vadd.f32 %v982, %v1187
    %v1204 = vadd.f32 %v983, %v1188
    %v1205 = vadd.f32 %v984, %v1189
    %v1206 = vadd.f32 %v985, %v1190
    %v1207 = vadd.f32 %v986, %v1191
    %v1208 = vadd.f32 %v987, %v1192
    %v1209 = vadd.f32 %v988, %v1193
    %v1210 = vadd.f32 %v989, %v1194
    %v1211 = vld [vmem:[%s0 + $0x5] sm:$0x1]
    %v1212 = vperm.slane %v1211, 0
    %vm1213 = vcmp.eq.s32.totalorder %v50, %v1212
    %vm1214 = vcmp.eq.s32.totalorder %v51, %v1212
    %vm1215 = vcmp.eq.s32.totalorder %v52, %v1212
    %vm1216 = vcmp.eq.s32.totalorder %v53, %v1212
    %vm1217 = vcmp.eq.s32.totalorder %v54, %v1212
    %vm1218 = vcmp.eq.s32.totalorder %v55, %v1212
    %vm1219 = vcmp.eq.s32.totalorder %v56, %v1212
    %vm1220 = vcmp.eq.s32.totalorder %v57, %v1212
    %v1221 = vsel %vm1213, 1, 0
    %v1222 = vsel %vm1214, 1, 0
    %v1223 = vsel %vm1215, 1, 0
    %v1224 = vsel %vm1216, 1, 0
    %v1225 = vsel %vm1217, 1, 0
    %v1226 = vsel %vm1218, 1, 0
    %v1227 = vsel %vm1219, 1, 0
    %v1228 = vsel %vm1220, 1, 0
    %v1229 = vcvt.s32.f32 %v1221
    %v1230 = vcvt.s32.f32 %v1222
    %v1231 = vcvt.s32.f32 %v1223
    %v1232 = vcvt.s32.f32 %v1224
    %v1233 = vcvt.s32.f32 %v1225
    %v1234 = vcvt.s32.f32 %v1226
    %v1235 = vcvt.s32.f32 %v1227
    %v1236 = vcvt.s32.f32 %v1228
    %1237 = vmatpush.msra.mxu0 0.0
    %1238 = vmatpush.msra.mxu0 0.0
    %1239 = vmatpush.msra.mxu0 0.0
    %1240 = vmatpush.msra.mxu0 0.0
    %1241 = vmatpush.msra.mxu0 0.0
    %1242 = vmatpush.msra.mxu0 0.0
    %1243 = vmatpush.msra.mxu0 0.0
    %1244 = vmatpush.msra.mxu0 0.0
    %1245 = vmatpush.msra.mxu0 %v1236
    %1246 = vmatpush.msra.mxu0 %v1235
    %1247 = vmatpush.msra.mxu0 %v1234
    %1248 = vmatpush.msra.mxu0 %v1233
    %1249 = vmatpush.msra.mxu0 %v1232
    %1250 = vmatpush.msra.mxu0 %v1231
    %1251 = vmatpush.msra.mxu0 %v1230
    %1252 = vmatpush.msra.mxu0 %v1229
    %1253 = vmatmul.f32.gmra.mxu0 %v85
    %v1254 = vpop.f32.mrf.mxu0
    %v1255 = vadd.f32 0.0, %v1254
    %1256 = vmatmul.f32.gmra.mxu0 %v88
    %v1257 = vpop.f32.mrf.mxu0
    %v1258 = vadd.f32 0.0, %v1257
    %1259 = vmatmul.f32.gmra.mxu0 %v91
    %v1260 = vpop.f32.mrf.mxu0
    %v1261 = vadd.f32 0.0, %v1260
    %1262 = vmatmul.f32.gmra.mxu0 %v94
    %v1263 = vpop.f32.mrf.mxu0
    %v1264 = vadd.f32 0.0, %v1263
    %1265 = vmatmul.f32.gmra.mxu0 %v97
    %v1266 = vpop.f32.mrf.mxu0
    %v1267 = vadd.f32 0.0, %v1266
    %1268 = vmatmul.f32.gmra.mxu0 %v100
    %v1269 = vpop.f32.mrf.mxu0
    %v1270 = vadd.f32 0.0, %v1269
    %1271 = vmatmul.f32.gmra.mxu0 %v103
    %v1272 = vpop.f32.mrf.mxu0
    %v1273 = vadd.f32 0.0, %v1272
    %1274 = vmatmul.f32.gmra.mxu0 %v106
    %v1275 = vpop.f32.mrf.mxu0
    %v1276 = vadd.f32 0.0, %v1275
    %1277 = vmatmul.f32.gmra.mxu0 %v109
    %v1278 = vpop.f32.mrf.mxu0
    %v1279 = vadd.f32 0.0, %v1278
    %1280 = vmatmul.f32.gmra.mxu0 %v112
    %v1281 = vpop.f32.mrf.mxu0
    %v1282 = vadd.f32 0.0, %v1281
    %1283 = vmatmul.f32.gmra.mxu0 %v115
    %v1284 = vpop.f32.mrf.mxu0
    %v1285 = vadd.f32 0.0, %v1284
    %1286 = vmatmul.f32.gmra.mxu0 %v118
    %v1287 = vpop.f32.mrf.mxu0
    %v1288 = vadd.f32 0.0, %v1287
    %1289 = vmatmul.f32.gmra.mxu0 %v121
    %v1290 = vpop.f32.mrf.mxu0
    %v1291 = vadd.f32 0.0, %v1290
    %1292 = vmatmul.f32.gmra.mxu0 %v124
    %v1293 = vpop.f32.mrf.mxu0
    %v1294 = vadd.f32 0.0, %v1293
    %1295 = vmatmul.f32.gmra.mxu0 %v127
    %v1296 = vpop.f32.mrf.mxu0
    %v1297 = vadd.f32 0.0, %v1296
    %1298 = vmatmul.f32.gmra.mxu0 %v130
    %v1299 = vpop.f32.mrf.mxu0
    %v1300 = vadd.f32 0.0, %v1299
    %1301 = vdwg.mxu0
    %v1302 = vmul.f32 %v1255, %v1255
    %v1303 = vmul.f32 %v1258, %v1258
    %v1304 = vmul.f32 %v1261, %v1261
    %v1305 = vmul.f32 %v1264, %v1264
    %v1306 = vmul.f32 %v1267, %v1267
    %v1307 = vmul.f32 %v1270, %v1270
    %v1308 = vmul.f32 %v1273, %v1273
    %v1309 = vmul.f32 %v1276, %v1276
    %v1310 = vmul.f32 %v1279, %v1279
    %v1311 = vmul.f32 %v1282, %v1282
    %v1312 = vmul.f32 %v1285, %v1285
    %v1313 = vmul.f32 %v1288, %v1288
    %v1314 = vmul.f32 %v1291, %v1291
    %v1315 = vmul.f32 %v1294, %v1294
    %v1316 = vmul.f32 %v1297, %v1297
    %v1317 = vmul.f32 %v1300, %v1300
    %v1318 = vadd.f32 %v1302, %v1303
    %v1319 = vadd.f32 %v1318, %v1304
    %v1320 = vadd.f32 %v1319, %v1305
    %v1321 = vadd.f32 %v1320, %v1306
    %v1322 = vadd.f32 %v1321, %v1307
    %v1323 = vadd.f32 %v1322, %v1308
    %v1324 = vadd.f32 %v1323, %v1309
    %v1325 = vadd.f32 %v1324, %v1310
    %v1326 = vadd.f32 %v1325, %v1311
    %v1327 = vadd.f32 %v1326, %v1312
    %v1328 = vadd.f32 %v1327, %v1313
    %v1329 = vadd.f32 %v1328, %v1314
    %v1330 = vadd.f32 %v1329, %v1315
    %v1331 = vadd.f32 %v1330, %v1316
    %v1332 = vadd.f32 %v1331, %v1317
    %v1333 = vrot.slane %v1332, 4
    %v1334 = vadd.f32 %v1332, %v1333
    %v1335 = vrot.slane %v1334, 2
    %v1336 = vadd.f32 %v1334, %v1335
    %v1337 = vrot.slane %v1336, 1
    %v1338 = vadd.f32 %v1336, %v1337
    %v1339 = vrsqrt.pop %v1338
    %v1340 = vmul.f32 %v1339, %v1338
    %v1341 = vmul.f32 %v1340, %v1339
    %v1342 = vmul.f32 0.5, %v1341
    %v1343 = vsub.f32 1.5, %v1342
    %v1344 = vmul.f32 %v1339, %v1343
    %v1345 = vmul.f32 %v1338, %v1344
    %vm1346 = vcmp.eq.f32.partialorder %v1338, inf
    %v1347 = vsel %vm1346, %v1338, %v1345
    %vm1348 = vcmp.eq.f32.partialorder %v1338, 0.0
    %v1349 = vand.u32 %v1338, 2147483648
    %v1350 = vsel %vm1348, %v1349, %v1347
    %v1351 = vmax.f32 %v1350, 1e-07
    %v1352 = vrcp.pop %v1351
    %v1353 = vmul.f32 %v1351, %v1352
    %v1354 = vsub.f32 1.0, %v1353
    %v1355 = vmul.f32 %v1352, %v1354
    %v1356 = vadd.f32 %v1352, %v1355
    %vm1357 = vweird.f32 %v1351
    %vm1358 = vweird.f32 %v1352
    %vm1359 = vmor %vm1357, %vm1358
    %v1360 = vsel %vm1359, %v1352, %v1356
    %v1361 = vand.u32 2147483647, %v1351
    %vm1362 = vcmp.eq.f32.partialorder %v1361, 8.507059e+37
    %v1363 = vand.u32 %v1351, 2147483648
    %v1364 = vor.u32 1.1754944e-38, %v1363
    %v1365 = vsel %vm1362, %v1364, %v1360
    %v1366 = vmul.f32 1.0, %v1365
    %v1367 = vmin.f32 %v1366, 1.0
    %v1368 = vmul.f32 %v1255, %v1367
    %v1369 = vmul.f32 %v1258, %v1367
    %v1370 = vmul.f32 %v1261, %v1367
    %v1371 = vmul.f32 %v1264, %v1367
    %v1372 = vmul.f32 %v1267, %v1367
    %v1373 = vmul.f32 %v1270, %v1367
    %v1374 = vmul.f32 %v1273, %v1367
    %v1375 = vmul.f32 %v1276, %v1367
    %v1376 = vmul.f32 %v1279, %v1367
    %v1377 = vmul.f32 %v1282, %v1367
    %v1378 = vmul.f32 %v1285, %v1367
    %v1379 = vmul.f32 %v1288, %v1367
    %v1380 = vmul.f32 %v1291, %v1367
    %v1381 = vmul.f32 %v1294, %v1367
    %v1382 = vmul.f32 %v1297, %v1367
    %v1383 = vmul.f32 %v1300, %v1367
    %v1384 = vadd.f32 %v1163, %v1368
    %v1385 = vadd.f32 %v1164, %v1369
    %v1386 = vadd.f32 %v1165, %v1370
    %v1387 = vadd.f32 %v1166, %v1371
    %v1388 = vadd.f32 %v1167, %v1372
    %v1389 = vadd.f32 %v1168, %v1373
    %v1390 = vadd.f32 %v1169, %v1374
    %v1391 = vadd.f32 %v1170, %v1375
    %v1392 = vadd.f32 %v1171, %v1376
    %v1393 = vadd.f32 %v1172, %v1377
    %v1394 = vadd.f32 %v1173, %v1378
    %v1395 = vadd.f32 %v1174, %v1379
    %v1396 = vadd.f32 %v1175, %v1380
    %v1397 = vadd.f32 %v1176, %v1381
    %v1398 = vadd.f32 %v1177, %v1382
    %v1399 = vadd.f32 %v1178, %v1383
    %v1400 = vmul.f32 %v1368, %v1368
    %v1401 = vmul.f32 %v1369, %v1369
    %v1402 = vmul.f32 %v1370, %v1370
    %v1403 = vmul.f32 %v1371, %v1371
    %v1404 = vmul.f32 %v1372, %v1372
    %v1405 = vmul.f32 %v1373, %v1373
    %v1406 = vmul.f32 %v1374, %v1374
    %v1407 = vmul.f32 %v1375, %v1375
    %v1408 = vmul.f32 %v1376, %v1376
    %v1409 = vmul.f32 %v1377, %v1377
    %v1410 = vmul.f32 %v1378, %v1378
    %v1411 = vmul.f32 %v1379, %v1379
    %v1412 = vmul.f32 %v1380, %v1380
    %v1413 = vmul.f32 %v1381, %v1381
    %v1414 = vmul.f32 %v1382, %v1382
    %v1415 = vmul.f32 %v1383, %v1383
    %v1416 = vadd.f32 %v1195, %v1400
    %v1417 = vadd.f32 %v1196, %v1401
    %v1418 = vadd.f32 %v1197, %v1402
    %v1419 = vadd.f32 %v1198, %v1403
    %v1420 = vadd.f32 %v1199, %v1404
    %v1421 = vadd.f32 %v1200, %v1405
    %v1422 = vadd.f32 %v1201, %v1406
    %v1423 = vadd.f32 %v1202, %v1407
    %v1424 = vadd.f32 %v1203, %v1408
    %v1425 = vadd.f32 %v1204, %v1409
    %v1426 = vadd.f32 %v1205, %v1410
    %v1427 = vadd.f32 %v1206, %v1411
    %v1428 = vadd.f32 %v1207, %v1412
    %v1429 = vadd.f32 %v1208, %v1413
    %v1430 = vadd.f32 %v1209, %v1414
    %v1431 = vadd.f32 %v1210, %v1415
    %v1432 = vmul.f32 %v1384, %v1384
    %v1433 = vmul.f32 %v1385, %v1385
    %v1434 = vmul.f32 %v1386, %v1386
    %v1435 = vmul.f32 %v1387, %v1387
    %v1436 = vmul.f32 %v1388, %v1388
    %v1437 = vmul.f32 %v1389, %v1389
    %v1438 = vmul.f32 %v1390, %v1390
    %v1439 = vmul.f32 %v1391, %v1391
    %v1440 = vmul.f32 %v1392, %v1392
    %v1441 = vmul.f32 %v1393, %v1393
    %v1442 = vmul.f32 %v1394, %v1394
    %v1443 = vmul.f32 %v1395, %v1395
    %v1444 = vmul.f32 %v1396, %v1396
    %v1445 = vmul.f32 %v1397, %v1397
    %v1446 = vmul.f32 %v1398, %v1398
    %v1447 = vmul.f32 %v1399, %v1399
    %v1448 = vsub.f32 %v1432, %v1416
    %v1449 = vsub.f32 %v1433, %v1417
    %v1450 = vsub.f32 %v1434, %v1418
    %v1451 = vsub.f32 %v1435, %v1419
    %v1452 = vsub.f32 %v1436, %v1420
    %v1453 = vsub.f32 %v1437, %v1421
    %v1454 = vsub.f32 %v1438, %v1422
    %v1455 = vsub.f32 %v1439, %v1423
    %v1456 = vsub.f32 %v1440, %v1424
    %v1457 = vsub.f32 %v1441, %v1425
    %v1458 = vsub.f32 %v1442, %v1426
    %v1459 = vsub.f32 %v1443, %v1427
    %v1460 = vsub.f32 %v1444, %v1428
    %v1461 = vsub.f32 %v1445, %v1429
    %v1462 = vsub.f32 %v1446, %v1430
    %v1463 = vsub.f32 %v1447, %v1431
    %v1464 = vld [vmem:[%s2] sm:$0xf]
    %v1465 = vld [vmem:[%s2 + $0x4] sm:$0xf]
    %v1466 = vld [vmem:[%s2 + $0x8] sm:$0xf]
    %v1467 = vld [vmem:[%s2 + $0xc] sm:$0xf]
    %v1468 = vld [vmem:[%s2 + $0x10] sm:$0xf]
    %v1469 = vld [vmem:[%s2 + $0x14] sm:$0xf]
    %v1470 = vld [vmem:[%s2 + $0x18] sm:$0xf]
    %v1471 = vld [vmem:[%s2 + $0x1c] sm:$0xf]
    %v1472 = vpack.c.bf16 %v1449, %v1448
    %v1473 = vpack.c.bf16 %v1451, %v1450
    %v1474 = vpack.c.bf16 %v1453, %v1452
    %v1475 = vpack.c.bf16 %v1455, %v1454
    %v1476 = vpack.c.bf16 %v1457, %v1456
    %v1477 = vpack.c.bf16 %v1459, %v1458
    %v1478 = vpack.c.bf16 %v1461, %v1460
    %v1479 = vpack.c.bf16 %v1463, %v1462
    %v1480 = vld [vmem:[%s3] sm:$0xff]
    %v1481 = vld [vmem:[%s3 + $0x8] sm:$0xff]
    %v1482 = vld [vmem:[%s3 + $0x10] sm:$0xff]
    %v1483 = vld [vmem:[%s3 + $0x18] sm:$0xff]
    %v1484 = vld [vmem:[%s3 + $0x20] sm:$0xff]
    %v1485 = vld [vmem:[%s3 + $0x28] sm:$0xff]
    %v1486 = vld [vmem:[%s3 + $0x30] sm:$0xff]
    %v1487 = vld [vmem:[%s3 + $0x38] sm:$0xff]
    %1489 = vset.pattern.permute.xlu0 0
    %1490 = vperm.xlu0 %1489, %v1480
    %v1491 = vpop.permute.xlu0 %1490
    %1494 = vset.pattern.permute.xlu0 0
    %1495 = vperm.xlu0 %1494, %v1481
    %v1496 = vpop.permute.xlu0 %1495
    %1499 = vset.pattern.permute.xlu0 0
    %1500 = vperm.xlu0 %1499, %v1482
    %v1501 = vpop.permute.xlu0 %1500
    %1504 = vset.pattern.permute.xlu0 0
    %1505 = vperm.xlu0 %1504, %v1483
    %v1506 = vpop.permute.xlu0 %1505
    %1509 = vset.pattern.permute.xlu0 0
    %1510 = vperm.xlu0 %1509, %v1484
    %v1511 = vpop.permute.xlu0 %1510
    %1514 = vset.pattern.permute.xlu0 0
    %1515 = vperm.xlu0 %1514, %v1485
    %v1516 = vpop.permute.xlu0 %1515
    %1519 = vset.pattern.permute.xlu0 0
    %1520 = vperm.xlu0 %1519, %v1486
    %v1521 = vpop.permute.xlu0 %1520
    %1524 = vset.pattern.permute.xlu0 0
    %1525 = vperm.xlu0 %1524, %v1487
    %v1526 = vpop.permute.xlu0 %1525
    %v1536 = vunpack.c.l.b16 %v1464
    %v1537 = vunpack.c.l.b16 %v1465
    %v1538 = vunpack.c.l.b16 %v1466
    %v1539 = vunpack.c.l.b16 %v1467
    %v1540 = vunpack.c.l.b16 %v1468
    %v1541 = vunpack.c.l.b16 %v1469
    %v1542 = vunpack.c.l.b16 %v1470
    %v1543 = vunpack.c.l.b16 %v1471
    %v1544 = vpack.c.b16 %v1537, %v1536
    %v1545 = vpack.c.b16 %v1539, %v1538
    %v1546 = vpack.c.b16 %v1541, %v1540
    %v1547 = vpack.c.b16 %v1543, %v1542
    %1552 = vmatpush.bf16.msra.mxu0 %v1479
    %1553 = vmatpush.bf16.msra.mxu0 %v1478
    %1554 = vmatpush.bf16.msra.mxu0 %v1477
    %1555 = vmatpush.bf16.msra.mxu0 %v1476
    %1556 = vmatpush.bf16.msra.mxu0 %v1475
    %1557 = vmatpush.bf16.msra.mxu0 %v1474
    %1558 = vmatpush.bf16.msra.mxu0 %v1473
    %1559 = vmatpush.bf16.msra.mxu0 %v1472
    %1560 = vmatmul.bf16.gmra.mxu0 %v1544
    %v1561 = vpop.f32.mrf.mxu0
    %v1562 = vadd.f32 %v1491, %v1561
    %v1563 = vpop.f32.mrf.mxu0
    %v1564 = vadd.f32 %v1496, %v1563
    %1565 = vmatmul.bf16.gmra.mxu0 %v1545
    %v1566 = vpop.f32.mrf.mxu0
    %v1567 = vadd.f32 %v1501, %v1566
    %v1568 = vpop.f32.mrf.mxu0
    %v1569 = vadd.f32 %v1506, %v1568
    %1570 = vmatmul.bf16.gmra.mxu0 %v1546
    %v1571 = vpop.f32.mrf.mxu0
    %v1572 = vadd.f32 %v1511, %v1571
    %v1573 = vpop.f32.mrf.mxu0
    %v1574 = vadd.f32 %v1516, %v1573
    %1575 = vmatmul.bf16.gmra.mxu0 %v1547
    %v1576 = vpop.f32.mrf.mxu0
    %v1577 = vadd.f32 %v1521, %v1576
    %v1578 = vpop.f32.mrf.mxu0
    %v1579 = vadd.f32 %v1526, %v1578
    %1580 = vdwg.mxu0
    %v1581 = vmax.f32 %v1562, 0.0
    %v1582 = vmax.f32 %v1564, 0.0
    %v1583 = vmax.f32 %v1567, 0.0
    %v1584 = vmax.f32 %v1569, 0.0
    %v1585 = vmax.f32 %v1572, 0.0
    %v1586 = vmax.f32 %v1574, 0.0
    %v1587 = vmax.f32 %v1577, 0.0
    %v1588 = vmax.f32 %v1579, 0.0
    %v1589 = vld [vmem:[%s4] sm:$0xf]
    %v1590 = vld [vmem:[%s4 + $0x4] sm:$0xf]
    %v1591 = vld [vmem:[%s4 + $0x8] sm:$0xf]
    %v1592 = vld [vmem:[%s4 + $0xc] sm:$0xf]
    %v1593 = vpack.c.bf16 %v1582, %v1581
    %v1594 = vpack.c.bf16 %v1584, %v1583
    %v1595 = vpack.c.bf16 %v1586, %v1585
    %v1596 = vpack.c.bf16 %v1588, %v1587
    %v1597 = vld [vmem:[%s5] sm:$0xff]
    %v1598 = vld [vmem:[%s5 + $0x8] sm:$0xff]
    %v1599 = vld [vmem:[%s5 + $0x10] sm:$0xff]
    %v1600 = vld [vmem:[%s5 + $0x18] sm:$0xff]
    %1602 = vset.pattern.permute.xlu0 0
    %1603 = vperm.xlu0 %1602, %v1597
    %v1604 = vpop.permute.xlu0 %1603
    %1607 = vset.pattern.permute.xlu0 0
    %1608 = vperm.xlu0 %1607, %v1598
    %v1609 = vpop.permute.xlu0 %1608
    %1612 = vset.pattern.permute.xlu0 0
    %1613 = vperm.xlu0 %1612, %v1599
    %v1614 = vpop.permute.xlu0 %1613
    %1617 = vset.pattern.permute.xlu0 0
    %1618 = vperm.xlu0 %1617, %v1600
    %v1619 = vpop.permute.xlu0 %1618
    %v1625 = vunpack.c.l.b16 %v1589
    %v1626 = vunpack.c.l.b16 %v1590
    %v1627 = vunpack.c.l.b16 %v1591
    %v1628 = vunpack.c.l.b16 %v1592
    %v1629 = vpack.c.b16 %v1626, %v1625
    %v1630 = vpack.c.b16 %v1628, %v1627
    %v1632 = vsel %vm83, %v1629, 0
    %v1635 = vsel %vm83, %v1630, 0
    %1637 = vmatpush.bf16.msra.mxu0 0
    %1638 = vmatpush.bf16.msra.mxu0 0
    %1639 = vmatpush.bf16.msra.mxu0 0
    %1640 = vmatpush.bf16.msra.mxu0 0
    %1641 = vmatpush.bf16.msra.mxu0 %v1596
    %1642 = vmatpush.bf16.msra.mxu0 %v1595
    %1643 = vmatpush.bf16.msra.mxu0 %v1594
    %1644 = vmatpush.bf16.msra.mxu0 %v1593
    %1645 = vmatmul.bf16.gmra.mxu0 %v1632
    %v1646 = vpop.f32.mrf.mxu0
    %v1647 = vadd.f32 %v1604, %v1646
    %v1648 = vpop.f32.mrf.mxu0
    %v1649 = vadd.f32 %v1609, %v1648
    %1650 = vmatmul.bf16.gmra.mxu0 %v1635
    %v1651 = vpop.f32.mrf.mxu0
    %v1652 = vadd.f32 %v1614, %v1651
    %v1653 = vpop.f32.mrf.mxu0
    %v1654 = vadd.f32 %v1619, %v1653
    %1655 = vdwg.mxu0
    %v1656 = vmax.f32 %v1647, 0.0
    %v1657 = vmax.f32 %v1649, 0.0
    %v1658 = vmax.f32 %v1652, 0.0
    %v1659 = vmax.f32 %v1654, 0.0
    %v1660 = vld [vmem:[%s6] sm:$0xff]
    %v1661 = vld [vmem:[%s6 + $0x8] sm:$0xff]
    %v1662 = vld [vmem:[%s6 + $0x10] sm:$0xff]
    %v1663 = vld [vmem:[%s6 + $0x18] sm:$0xff]
    %1665 = vset.pattern.permute.xlu0 0
    %1666 = vperm.xlu0 %1665, %v1660
    %v1667 = vpop.permute.xlu0 %1666
    %1670 = vset.pattern.permute.xlu0 0
    %1671 = vperm.xlu0 %1670, %v1661
    %v1672 = vpop.permute.xlu0 %1671
    %1675 = vset.pattern.permute.xlu0 0
    %1676 = vperm.xlu0 %1675, %v1662
    %v1677 = vpop.permute.xlu0 %1676
    %1680 = vset.pattern.permute.xlu0 0
    %1681 = vperm.xlu0 %1680, %v1663
    %v1682 = vpop.permute.xlu0 %1681
    %v1684 = vmul.f32 %v1656, %v1667
    %v1685 = vmul.f32 %v1657, %v1672
    %v1686 = vmul.f32 %v1658, %v1677
    %v1687 = vmul.f32 %v1659, %v1682
    %v1688 = vadd.f32 %v1684, %v1685
    %v1689 = vadd.f32 %v1688, %v1686
    %v1690 = vadd.f32 %v1689, %v1687
    %v1691 = vrot.slane %v1690, 4
    %v1692 = vadd.f32 %v1690, %v1691
    %v1693 = vrot.slane %v1692, 2
    %v1694 = vadd.f32 %v1692, %v1693
    %v1695 = vrot.slane %v1694, 1
    %v1696 = vadd.f32 %v1694, %v1695
    %s1697 = sld [smem:[#allocation2]]
    %v1698 = vstv %s1697
    %v1699 = vadd.f32 %v1696, %v1698
    %v1700 = vxor.u32 %v1699, 2147483648
    %v1701 = vmul.f32 %v1700, 1.442695
    %v1702 = vpow.pop %v1701
    %v1703 = vadd.f32 %v1702, 1.0
    %v1704 = vrcp.pop %v1703
    %v1705 = vmul.f32 %v1703, %v1704
    %v1706 = vsub.f32 1.0, %v1705
    %v1707 = vmul.f32 %v1704, %v1706
    %v1708 = vadd.f32 %v1704, %v1707
    %vm1709 = vweird.f32 %v1703
    %vm1710 = vweird.f32 %v1704
    %vm1711 = vmor %vm1709, %vm1710
    %v1712 = vsel %vm1711, %v1704, %v1708
    %v1713 = vand.u32 2147483647, %v1703
    %vm1714 = vcmp.eq.f32.partialorder %v1713, 8.507059e+37
    %v1715 = vand.u32 %v1703, 2147483648
    %v1716 = vor.u32 1.1754944e-38, %v1715
    %v1717 = vsel %vm1714, %v1716, %v1712
    %v1718 = vmul.f32 1.0, %v1717
    %1719 = vst [vmem:[#allocation3] sm:$0x1] %v1718
    // Predicated region
    $region34: #{tpu_custom_call.1} parent=1 // pred_check
      _
    $region35: #{tpu_custom_call.1} parent=1 // pred_check_branch
      %1721 = sbr.rel (0) target = $region37
    $region36: #{tpu_custom_call.1} parent=1 // pred_region
      %1723 = vsyncadd [#allocation4], 0
      %s1725 = sshll.u32 [#allocation3], 4
      %s1726 = int_to_ptr.vmem [resolvable:$true] %s1725
      %s1727 = sshll.u32 %s8, 4
      %s1728 = int_to_ptr.hbm [resolvable:$true] %s1727
      %1730 = dma.vmem_to_hbm [thread:$0]  %s1726, 16, %s1728, [#allocation4]
    $region37: #{tpu_custom_call.1} parent=1 // pred_fallthru
      _
    // Predicated region
    $region38: #{tpu_custom_call.1} parent=1 // pred_check
      _
    $region39: #{tpu_custom_call.1} parent=1 // pred_check_branch
      %1732 = sbr.rel (0) target = $region41
    $region40: #{tpu_custom_call.1} parent=1 // pred_region
      %1734 = dma.done [#allocation4], 16
    $region41: #{tpu_custom_call.1} parent=1 // pred_fallthru
      _
    %1735 = vsyncpa [#allocation4], 1

</llo_original>
